<compile_context>
chip_gen: v7x
topology: tpu7x:2x2x1
jax: 0.10.0
libtpu: 0.0.40
codegen_flags: <defaults>
</compile_context>

<pallas_src>
import jax
import jax.numpy as jnp
from jax.experimental import pallas as pl
from jax.experimental.pallas import tpu as pltpu


def _generator_kernel(
    z_ref,
    w1_ref, b1_ref,
    w2_ref, b2_ref, g2_ref, bt2_ref,
    w3_ref, b3_ref, g3_ref, bt3_ref,
    w4_hbm, b4_ref, g4_ref, bt4_ref,
    w5_hbm, b5_ref,
    o_ref,
    w4_buf, w5_buf, dma_sem,
):
    """Fused 5-layer MLP; W4/W5 streamed manually to overlap DMA with compute."""

    # Start the two big weight DMAs immediately; they complete while layers
    # 1-3 run on the MXU/VPU.
    cp4 = pltpu.make_async_copy(w4_hbm, w4_buf, dma_sem.at[0])
    cp5 = pltpu.make_async_copy(w5_hbm, w5_buf, dma_sem.at[1])
    cp4.start()
    cp5.start()

    def dense(x_f32, w_bf16, b_ref):
        # bf16 operands on the MXU, f32 accumulation; bias add in f32.
        y = jnp.dot(
            x_f32.astype(jnp.bfloat16),
            w_bf16,
            preferred_element_type=jnp.float32,
        )
        return y + b_ref[...]

    def batchnorm(y, g_ref, bt_ref):
        # Training-mode batch stats (biased variance), eps=0.8.
        # Fused affine: all the per-feature math is (1, N); the (B, N) tensor
        # is touched exactly once (y * scale + shift).
        mean = jnp.mean(y, axis=0, keepdims=True)
        var = jnp.maximum(
            jnp.mean(y * y, axis=0, keepdims=True) - mean * mean, 0.0
        )
        scale = g_ref[...] * jax.lax.rsqrt(var + 0.8)
        shift = bt_ref[...] - mean * scale
        return y * scale + shift

    def leaky(y):
        return jnp.maximum(y, 0.2 * y)  # LeakyReLU(0.2)

    h = leaky(dense(z_ref[...], w1_ref[...], b1_ref))                     # no BN
    h = leaky(batchnorm(dense(h, w2_ref[...], b2_ref), g2_ref, bt2_ref))
    h = leaky(batchnorm(dense(h, w3_ref[...], b3_ref), g3_ref, bt3_ref))
    cp4.wait()
    h = leaky(batchnorm(dense(h, w4_buf[...], b4_ref), g4_ref, bt4_ref))
    cp5.wait()
    o_ref[...] = jnp.tanh(dense(h, w5_buf[...], b5_ref))                  # head


def init_generator_params(key, latent_dim, image_shape):
    """Deterministic synthetic parameters with PyTorch-module-equivalent shapes."""
    c, h, w = image_shape
    out_dim = c * h * w
    dims = [latent_dim, 128, 256, 512, 1024, out_dim]
    use_bn = [False, True, True, True, False]

    params = []
    for li in range(5):
        key, kw, kb = jax.random.split(key, 3)
        din, dout = dims[li], dims[li + 1]
        # weight stored (in, out) so the kernel computes x @ W; bf16 for MXU.
        W = (jax.random.normal(kw, (din, dout), jnp.float32) * 0.05).astype(
            jnp.bfloat16
        )
        b = jax.random.normal(kb, (1, dout), jnp.float32) * 0.01
        layer = {"W": W, "b": b}
        if use_bn[li]:
            layer["gamma"] = jnp.ones((1, dout), jnp.float32)
            layer["beta"] = jnp.zeros((1, dout), jnp.float32)
        params.append(layer)
    return params


def generator_forward(z, params, image_shape):
    """z: (B, latent_dim) -> img: (B, C, H, W)  (NCHW, like the PyTorch module).

    NOTE: larger B amortizes fixed DMA / MXU weight-staging costs nearly
    linearly up to B ~ 128-256 rows; BN batch stats require the whole batch in
    this single block (grid=()), which is what this wrapper does.
    """
    B, latent_dim = z.shape
    c, h, w = image_shape
    out_dim = c * h * w

    # Lane-dense output: pad the final feature dim up to a multiple of 128
    # (zero columns in W5/b5 -> tanh(0)=0 in the padding, sliced off below).
    out_pad = ((out_dim + 127) // 128) * 128
    w5 = params[4]["W"]
    b5 = params[4]["b"]
    if out_pad != out_dim:
        w5 = jnp.pad(w5, ((0, 0), (0, out_pad - out_dim)))
        b5 = jnp.pad(b5, ((0, 0), (0, out_pad - out_dim)))

    # Flat arg list matching the kernel signature.
    args = [z]
    for li, layer in enumerate(params):
        args.append(w5 if li == 4 else layer["W"])
        args.append(b5 if li == 4 else layer["b"])
        if "gamma" in layer:
            args.append(layer["gamma"])
            args.append(layer["beta"])

    vmem_spec = pl.BlockSpec(memory_space=pltpu.MemorySpace.VMEM)
    any_spec = pl.BlockSpec(memory_space=pl.ANY)   # manual HBM->VMEM DMA in-kernel
    in_specs = []
    for i, a in enumerate(args):
        # args[11] = W4, args[15] = W5 (padded): keep in HBM, copy manually.
        in_specs.append(any_spec if i in (11, 15) else vmem_spec)

    # --- cost estimate (hint for XLA's scheduler around the custom call) ---
    dims = [latent_dim, 128, 256, 512, 1024, out_pad]
    flops = 2 * B * sum(dims[i] * dims[i + 1] for i in range(5))
    transcendentals = B * out_pad + (256 + 512 + 1024)          # tanh + rsqrt
    weight_bytes = sum(dims[i] * dims[i + 1] for i in range(5)) * 2  # bf16
    bytes_accessed = weight_bytes + B * (latent_dim + out_pad) * 4

    # --- VMEM budget derived from the actual footprint (v7x has 64 MiB) ---
    act_bytes = B * sum(dims[1:]) * 4                           # f32 activations
    dma_scratch = (512 * 1024 + 1024 * out_pad) * 2             # W4/W5 bf16 copies
    vmem_limit = 2 * (weight_bytes + act_bytes + dma_scratch) + (4 << 20)
    vmem_limit = int(min(max(vmem_limit, 16 << 20), 48 << 20))

    flat = pl.pallas_call(
        _generator_kernel,
        out_shape=jax.ShapeDtypeStruct((B, out_pad), jnp.float32),
        in_specs=in_specs,
        out_specs=vmem_spec,
        scratch_shapes=[
            pltpu.VMEM((512, 1024), jnp.bfloat16),      # W4 landing buffer
            pltpu.VMEM((1024, out_pad), jnp.bfloat16),  # W5 landing buffer
            pltpu.SemaphoreType.DMA((2,)),
        ],
        compiler_params=pltpu.CompilerParams(vmem_limit_bytes=vmem_limit),
        cost_estimate=pl.CostEstimate(
            flops=flops,
            transcendentals=transcendentals,
            bytes_accessed=bytes_accessed,
        ),
    )(*args)

    if out_pad != out_dim:
        flat = flat[:, :out_dim]
    return flat.reshape(B, c, h, w)


if __name__ == "__main__":
    image_shape = (1, 16, 16)      # (C, H, W) -> prod = 256
    latent_dim = 32
    batch = 8                      # >=2 so batch-stat BatchNorm is well defined

    key = jax.random.PRNGKey(0)
    kz, kp = jax.random.split(key)
    z = jax.random.normal(kz, (batch, latent_dim), jnp.float32)
    params = init_generator_params(kp, latent_dim, image_shape)

    img = generator_forward(z, params, image_shape)
    img = jax.block_until_ready(img)

    assert img.shape == (batch, *image_shape), img.shape
    assert img.dtype == jnp.float32
    assert bool(jnp.all(jnp.isfinite(img)))
    assert bool(jnp.all(jnp.abs(img) <= 1.0))  # tanh output range
    print("KERNEL_OK")
</pallas_src>

<mosaic_0001>
module attributes {stable_mosaic.version = 11 : i64} {
  func.func @_generator_kernel(%arg0: memref<8x32xf32, #tpu.memory_space<vmem>>, %arg1: memref<32x128xbf16, #tpu.memory_space<vmem>>, %arg2: memref<1x128xf32, #tpu.memory_space<vmem>>, %arg3: memref<128x256xbf16, #tpu.memory_space<vmem>>, %arg4: memref<1x256xf32, #tpu.memory_space<vmem>>, %arg5: memref<1x256xf32, #tpu.memory_space<vmem>>, %arg6: memref<1x256xf32, #tpu.memory_space<vmem>>, %arg7: memref<256x512xbf16, #tpu.memory_space<vmem>>, %arg8: memref<1x512xf32, #tpu.memory_space<vmem>>, %arg9: memref<1x512xf32, #tpu.memory_space<vmem>>, %arg10: memref<1x512xf32, #tpu.memory_space<vmem>>, %arg11: memref<512x1024xbf16, #tpu.memory_space<any>>, %arg12: memref<1x1024xf32, #tpu.memory_space<vmem>>, %arg13: memref<1x1024xf32, #tpu.memory_space<vmem>>, %arg14: memref<1x1024xf32, #tpu.memory_space<vmem>>, %arg15: memref<1024x256xbf16, #tpu.memory_space<any>>, %arg16: memref<1x256xf32, #tpu.memory_space<vmem>>, %arg17: memref<8x256xf32, #tpu.memory_space<vmem>>, %arg18: memref<512x1024xbf16, #tpu.memory_space<vmem>>, %arg19: memref<1024x256xbf16, #tpu.memory_space<vmem>>, %arg20: memref<2x!tpu.dma_semaphore, #tpu.memory_space<semaphore_mem>>) attributes {dimension_semantics = [], scalar_prefetch = 0 : i64, scratch_operands = 3 : i64, tpu.core_type = #tpu.core_type<tc>} {
    %c0_i32 = arith.constant 0 : i32
    %0 = tpu.memref_slice %arg20[%c0_i32] : memref<2x!tpu.dma_semaphore, #tpu.memory_space<semaphore_mem>> -> memref<1x!tpu.dma_semaphore, #tpu.memory_space<semaphore_mem>>
    %1 = tpu.memref_squeeze %0 : memref<1x!tpu.dma_semaphore, #tpu.memory_space<semaphore_mem>> -> memref<!tpu.dma_semaphore, #tpu.memory_space<semaphore_mem>>
    tpu.enqueue_dma source(%arg11 : memref<512x1024xbf16, #tpu.memory_space<any>>) target(%arg18 : memref<512x1024xbf16, #tpu.memory_space<vmem>>) target_semaphore(%1 : memref<!tpu.dma_semaphore, #tpu.memory_space<semaphore_mem>>)
    %c1_i32 = arith.constant 1 : i32
    %2 = tpu.memref_slice %arg20[%c1_i32] : memref<2x!tpu.dma_semaphore, #tpu.memory_space<semaphore_mem>> -> memref<1x!tpu.dma_semaphore, #tpu.memory_space<semaphore_mem>>
    %3 = tpu.memref_squeeze %2 : memref<1x!tpu.dma_semaphore, #tpu.memory_space<semaphore_mem>> -> memref<!tpu.dma_semaphore, #tpu.memory_space<semaphore_mem>>
    tpu.enqueue_dma source(%arg15 : memref<1024x256xbf16, #tpu.memory_space<any>>) target(%arg19 : memref<1024x256xbf16, #tpu.memory_space<vmem>>) target_semaphore(%3 : memref<!tpu.dma_semaphore, #tpu.memory_space<semaphore_mem>>)
    %c0 = arith.constant 0 : index
    %c0_0 = arith.constant 0 : index
    %4 = vector.load %arg0[%c0, %c0_0] : memref<8x32xf32, #tpu.memory_space<vmem>>, vector<8x32xf32>
    %c0_1 = arith.constant 0 : index
    %c0_2 = arith.constant 0 : index
    %5 = vector.load %arg1[%c0_1, %c0_2] : memref<32x128xbf16, #tpu.memory_space<vmem>>, vector<32x128xbf16>
    %6 = arith.truncf %4 : vector<8x32xf32> to vector<8x32xbf16>
    %cst = arith.constant dense<0.000000e+00> : vector<8x128xf32>
    %7 = tpu.matmul %6, %5, %cst {dimension_numbers = #tpu.dot_dimension_numbers<[1], [0], [0], [1], [0, 0, 1, 1], [], []>} : vector<8x32xbf16>, vector<32x128xbf16>, vector<8x128xf32> -> vector<8x128xf32>
    %c0_3 = arith.constant 0 : index
    %c0_4 = arith.constant 0 : index
    %8 = vector.load %arg2[%c0_3, %c0_4] : memref<1x128xf32, #tpu.memory_space<vmem>>, vector<1x128xf32>
    %9 = vector.broadcast %8 : vector<1x128xf32> to vector<8x128xf32>
    %10 = arith.addf %7, %9 : vector<8x128xf32>
    %cst_5 = arith.constant 2.000000e-01 : f32
    %11 = vector.broadcast %cst_5 : f32 to vector<8x128xf32>
    %12 = arith.mulf %11, %10 : vector<8x128xf32>
    %13 = arith.maximumf %10, %12 : vector<8x128xf32>
    %c0_6 = arith.constant 0 : index
    %c0_7 = arith.constant 0 : index
    %14 = vector.load %arg3[%c0_6, %c0_7] : memref<128x256xbf16, #tpu.memory_space<vmem>>, vector<128x256xbf16>
    %15 = arith.truncf %13 : vector<8x128xf32> to vector<8x128xbf16>
    %cst_8 = arith.constant dense<0.000000e+00> : vector<8x256xf32>
    %16 = tpu.matmul %15, %14, %cst_8 {dimension_numbers = #tpu.dot_dimension_numbers<[1], [0], [0], [1], [0, 0, 1, 1], [], []>} : vector<8x128xbf16>, vector<128x256xbf16>, vector<8x256xf32> -> vector<8x256xf32>
    %c0_9 = arith.constant 0 : index
    %c0_10 = arith.constant 0 : index
    %17 = vector.load %arg4[%c0_9, %c0_10] : memref<1x256xf32, #tpu.memory_space<vmem>>, vector<1x256xf32>
    %18 = vector.broadcast %17 : vector<1x256xf32> to vector<8x256xf32>
    %19 = arith.addf %16, %18 : vector<8x256xf32>
    %cst_11 = arith.constant dense<0.000000e+00> : vector<256xf32>
    %20 = vector.multi_reduction <add>, %19, %cst_11 [0] : vector<8x256xf32> to vector<256xf32>
    %21 = vector.shape_cast %20 : vector<256xf32> to vector<1x256xf32>
    %cst_12 = arith.constant 8.000000e+00 : f32
    %22 = vector.broadcast %cst_12 : f32 to vector<1x256xf32>
    %23 = arith.divf %21, %22 : vector<1x256xf32>
    %24 = arith.mulf %19, %19 : vector<8x256xf32>
    %cst_13 = arith.constant dense<0.000000e+00> : vector<256xf32>
    %25 = vector.multi_reduction <add>, %24, %cst_13 [0] : vector<8x256xf32> to vector<256xf32>
    %26 = vector.shape_cast %25 : vector<256xf32> to vector<1x256xf32>
    %cst_14 = arith.constant 8.000000e+00 : f32
    %27 = vector.broadcast %cst_14 : f32 to vector<1x256xf32>
    %28 = arith.divf %26, %27 : vector<1x256xf32>
    %29 = arith.mulf %23, %23 : vector<1x256xf32>
    %30 = arith.subf %28, %29 : vector<1x256xf32>
    %cst_15 = arith.constant 0.000000e+00 : f32
    %31 = vector.broadcast %cst_15 : f32 to vector<1x256xf32>
    %32 = arith.maximumf %30, %31 : vector<1x256xf32>
    %c0_16 = arith.constant 0 : index
    %c0_17 = arith.constant 0 : index
    %33 = vector.load %arg5[%c0_16, %c0_17] : memref<1x256xf32, #tpu.memory_space<vmem>>, vector<1x256xf32>
    %cst_18 = arith.constant 8.000000e-01 : f32
    %34 = vector.broadcast %cst_18 : f32 to vector<1x256xf32>
    %35 = arith.addf %32, %34 : vector<1x256xf32>
    %36 = math.rsqrt %35 : vector<1x256xf32>
    %37 = arith.mulf %33, %36 : vector<1x256xf32>
    %c0_19 = arith.constant 0 : index
    %c0_20 = arith.constant 0 : index
    %38 = vector.load %arg6[%c0_19, %c0_20] : memref<1x256xf32, #tpu.memory_space<vmem>>, vector<1x256xf32>
    %39 = arith.mulf %23, %37 : vector<1x256xf32>
    %40 = arith.subf %38, %39 : vector<1x256xf32>
    %41 = vector.broadcast %37 : vector<1x256xf32> to vector<8x256xf32>
    %42 = arith.mulf %19, %41 : vector<8x256xf32>
    %43 = vector.broadcast %40 : vector<1x256xf32> to vector<8x256xf32>
    %44 = arith.addf %42, %43 : vector<8x256xf32>
    %cst_21 = arith.constant 2.000000e-01 : f32
    %45 = vector.broadcast %cst_21 : f32 to vector<8x256xf32>
    %46 = arith.mulf %45, %44 : vector<8x256xf32>
    %47 = arith.maximumf %44, %46 : vector<8x256xf32>
    %c0_22 = arith.constant 0 : index
    %c0_23 = arith.constant 0 : index
    %48 = vector.load %arg7[%c0_22, %c0_23] : memref<256x512xbf16, #tpu.memory_space<vmem>>, vector<256x512xbf16>
    %49 = arith.truncf %47 : vector<8x256xf32> to vector<8x256xbf16>
    %cst_24 = arith.constant dense<0.000000e+00> : vector<8x512xf32>
    %50 = tpu.matmul %49, %48, %cst_24 {dimension_numbers = #tpu.dot_dimension_numbers<[1], [0], [0], [1], [0, 0, 1, 1], [], []>} : vector<8x256xbf16>, vector<256x512xbf16>, vector<8x512xf32> -> vector<8x512xf32>
    %c0_25 = arith.constant 0 : index
    %c0_26 = arith.constant 0 : index
    %51 = vector.load %arg8[%c0_25, %c0_26] : memref<1x512xf32, #tpu.memory_space<vmem>>, vector<1x512xf32>
    %52 = vector.broadcast %51 : vector<1x512xf32> to vector<8x512xf32>
    %53 = arith.addf %50, %52 : vector<8x512xf32>
    %cst_27 = arith.constant dense<0.000000e+00> : vector<512xf32>
    %54 = vector.multi_reduction <add>, %53, %cst_27 [0] : vector<8x512xf32> to vector<512xf32>
    %55 = vector.shape_cast %54 : vector<512xf32> to vector<1x512xf32>
    %cst_28 = arith.constant 8.000000e+00 : f32
    %56 = vector.broadcast %cst_28 : f32 to vector<1x512xf32>
    %57 = arith.divf %55, %56 : vector<1x512xf32>
    %58 = arith.mulf %53, %53 : vector<8x512xf32>
    %cst_29 = arith.constant dense<0.000000e+00> : vector<512xf32>
    %59 = vector.multi_reduction <add>, %58, %cst_29 [0] : vector<8x512xf32> to vector<512xf32>
    %60 = vector.shape_cast %59 : vector<512xf32> to vector<1x512xf32>
    %cst_30 = arith.constant 8.000000e+00 : f32
    %61 = vector.broadcast %cst_30 : f32 to vector<1x512xf32>
    %62 = arith.divf %60, %61 : vector<1x512xf32>
    %63 = arith.mulf %57, %57 : vector<1x512xf32>
    %64 = arith.subf %62, %63 : vector<1x512xf32>
    %cst_31 = arith.constant 0.000000e+00 : f32
    %65 = vector.broadcast %cst_31 : f32 to vector<1x512xf32>
    %66 = arith.maximumf %64, %65 : vector<1x512xf32>
    %c0_32 = arith.constant 0 : index
    %c0_33 = arith.constant 0 : index
    %67 = vector.load %arg9[%c0_32, %c0_33] : memref<1x512xf32, #tpu.memory_space<vmem>>, vector<1x512xf32>
    %cst_34 = arith.constant 8.000000e-01 : f32
    %68 = vector.broadcast %cst_34 : f32 to vector<1x512xf32>
    %69 = arith.addf %66, %68 : vector<1x512xf32>
    %70 = math.rsqrt %69 : vector<1x512xf32>
    %71 = arith.mulf %67, %70 : vector<1x512xf32>
    %c0_35 = arith.constant 0 : index
    %c0_36 = arith.constant 0 : index
    %72 = vector.load %arg10[%c0_35, %c0_36] : memref<1x512xf32, #tpu.memory_space<vmem>>, vector<1x512xf32>
    %73 = arith.mulf %57, %71 : vector<1x512xf32>
    %74 = arith.subf %72, %73 : vector<1x512xf32>
    %75 = vector.broadcast %71 : vector<1x512xf32> to vector<8x512xf32>
    %76 = arith.mulf %53, %75 : vector<8x512xf32>
    %77 = vector.broadcast %74 : vector<1x512xf32> to vector<8x512xf32>
    %78 = arith.addf %76, %77 : vector<8x512xf32>
    %cst_37 = arith.constant 2.000000e-01 : f32
    %79 = vector.broadcast %cst_37 : f32 to vector<8x512xf32>
    %80 = arith.mulf %79, %78 : vector<8x512xf32>
    %81 = arith.maximumf %78, %80 : vector<8x512xf32>
    %c0_i32_38 = arith.constant 0 : i32
    %82 = tpu.memref_slice %arg20[%c0_i32_38] : memref<2x!tpu.dma_semaphore, #tpu.memory_space<semaphore_mem>> -> memref<1x!tpu.dma_semaphore, #tpu.memory_space<semaphore_mem>>
    %83 = tpu.memref_squeeze %82 : memref<1x!tpu.dma_semaphore, #tpu.memory_space<semaphore_mem>> -> memref<!tpu.dma_semaphore, #tpu.memory_space<semaphore_mem>>
    tpu.wait_dma2 semaphore(%83 : memref<!tpu.dma_semaphore, #tpu.memory_space<semaphore_mem>>) src(%arg11 : memref<512x1024xbf16, #tpu.memory_space<any>>) dst(%arg18 : memref<512x1024xbf16, #tpu.memory_space<vmem>>)
    %c0_39 = arith.constant 0 : index
    %c0_40 = arith.constant 0 : index
    %84 = vector.load %arg18[%c0_39, %c0_40] : memref<512x1024xbf16, #tpu.memory_space<vmem>>, vector<512x1024xbf16>
    %85 = arith.truncf %81 : vector<8x512xf32> to vector<8x512xbf16>
    %cst_41 = arith.constant dense<0.000000e+00> : vector<8x1024xf32>
    %86 = tpu.matmul %85, %84, %cst_41 {dimension_numbers = #tpu.dot_dimension_numbers<[1], [0], [0], [1], [0, 0, 1, 1], [], []>} : vector<8x512xbf16>, vector<512x1024xbf16>, vector<8x1024xf32> -> vector<8x1024xf32>
    %c0_42 = arith.constant 0 : index
    %c0_43 = arith.constant 0 : index
    %87 = vector.load %arg12[%c0_42, %c0_43] : memref<1x1024xf32, #tpu.memory_space<vmem>>, vector<1x1024xf32>
    %88 = vector.broadcast %87 : vector<1x1024xf32> to vector<8x1024xf32>
    %89 = arith.addf %86, %88 : vector<8x1024xf32>
    %cst_44 = arith.constant dense<0.000000e+00> : vector<1024xf32>
    %90 = vector.multi_reduction <add>, %89, %cst_44 [0] : vector<8x1024xf32> to vector<1024xf32>
    %91 = vector.shape_cast %90 : vector<1024xf32> to vector<1x1024xf32>
    %cst_45 = arith.constant 8.000000e+00 : f32
    %92 = vector.broadcast %cst_45 : f32 to vector<1x1024xf32>
    %93 = arith.divf %91, %92 : vector<1x1024xf32>
    %94 = arith.mulf %89, %89 : vector<8x1024xf32>
    %cst_46 = arith.constant dense<0.000000e+00> : vector<1024xf32>
    %95 = vector.multi_reduction <add>, %94, %cst_46 [0] : vector<8x1024xf32> to vector<1024xf32>
    %96 = vector.shape_cast %95 : vector<1024xf32> to vector<1x1024xf32>
    %cst_47 = arith.constant 8.000000e+00 : f32
    %97 = vector.broadcast %cst_47 : f32 to vector<1x1024xf32>
    %98 = arith.divf %96, %97 : vector<1x1024xf32>
    %99 = arith.mulf %93, %93 : vector<1x1024xf32>
    %100 = arith.subf %98, %99 : vector<1x1024xf32>
    %cst_48 = arith.constant 0.000000e+00 : f32
    %101 = vector.broadcast %cst_48 : f32 to vector<1x1024xf32>
    %102 = arith.maximumf %100, %101 : vector<1x1024xf32>
    %c0_49 = arith.constant 0 : index
    %c0_50 = arith.constant 0 : index
    %103 = vector.load %arg13[%c0_49, %c0_50] : memref<1x1024xf32, #tpu.memory_space<vmem>>, vector<1x1024xf32>
    %cst_51 = arith.constant 8.000000e-01 : f32
    %104 = vector.broadcast %cst_51 : f32 to vector<1x1024xf32>
    %105 = arith.addf %102, %104 : vector<1x1024xf32>
    %106 = math.rsqrt %105 : vector<1x1024xf32>
    %107 = arith.mulf %103, %106 : vector<1x1024xf32>
    %c0_52 = arith.constant 0 : index
    %c0_53 = arith.constant 0 : index
    %108 = vector.load %arg14[%c0_52, %c0_53] : memref<1x1024xf32, #tpu.memory_space<vmem>>, vector<1x1024xf32>
    %109 = arith.mulf %93, %107 : vector<1x1024xf32>
    %110 = arith.subf %108, %109 : vector<1x1024xf32>
    %111 = vector.broadcast %107 : vector<1x1024xf32> to vector<8x1024xf32>
    %112 = arith.mulf %89, %111 : vector<8x1024xf32>
    %113 = vector.broadcast %110 : vector<1x1024xf32> to vector<8x1024xf32>
    %114 = arith.addf %112, %113 : vector<8x1024xf32>
    %cst_54 = arith.constant 2.000000e-01 : f32
    %115 = vector.broadcast %cst_54 : f32 to vector<8x1024xf32>
    %116 = arith.mulf %115, %114 : vector<8x1024xf32>
    %117 = arith.maximumf %114, %116 : vector<8x1024xf32>
    %c1_i32_55 = arith.constant 1 : i32
    %118 = tpu.memref_slice %arg20[%c1_i32_55] : memref<2x!tpu.dma_semaphore, #tpu.memory_space<semaphore_mem>> -> memref<1x!tpu.dma_semaphore, #tpu.memory_space<semaphore_mem>>
    %119 = tpu.memref_squeeze %118 : memref<1x!tpu.dma_semaphore, #tpu.memory_space<semaphore_mem>> -> memref<!tpu.dma_semaphore, #tpu.memory_space<semaphore_mem>>
    tpu.wait_dma2 semaphore(%119 : memref<!tpu.dma_semaphore, #tpu.memory_space<semaphore_mem>>) src(%arg15 : memref<1024x256xbf16, #tpu.memory_space<any>>) dst(%arg19 : memref<1024x256xbf16, #tpu.memory_space<vmem>>)
    %c0_56 = arith.constant 0 : index
    %c0_57 = arith.constant 0 : index
    %120 = vector.load %arg19[%c0_56, %c0_57] : memref<1024x256xbf16, #tpu.memory_space<vmem>>, vector<1024x256xbf16>
    %121 = arith.truncf %117 : vector<8x1024xf32> to vector<8x1024xbf16>
    %cst_58 = arith.constant dense<0.000000e+00> : vector<8x256xf32>
    %122 = tpu.matmul %121, %120, %cst_58 {dimension_numbers = #tpu.dot_dimension_numbers<[1], [0], [0], [1], [0, 0, 1, 1], [], []>} : vector<8x1024xbf16>, vector<1024x256xbf16>, vector<8x256xf32> -> vector<8x256xf32>
    %c0_59 = arith.constant 0 : index
    %c0_60 = arith.constant 0 : index
    %123 = vector.load %arg16[%c0_59, %c0_60] : memref<1x256xf32, #tpu.memory_space<vmem>>, vector<1x256xf32>
    %124 = vector.broadcast %123 : vector<1x256xf32> to vector<8x256xf32>
    %125 = arith.addf %122, %124 : vector<8x256xf32>
    %126 = math.tanh %125 : vector<8x256xf32>
    %c0_61 = arith.constant 0 : index
    %c0_62 = arith.constant 0 : index
    %127 = vector.load %arg17[%c0_61, %c0_62] : memref<8x256xf32, #tpu.memory_space<vmem>>, vector<8x256xf32>
    tpu.vector_store %arg17[%c0_61, %c0_62], %126 {strides = array<i32>} : memref<8x256xf32, #tpu.memory_space<vmem>>, vector<8x256xf32>,
    return
  }
}

</mosaic_0001>

<llo_original>
// kernel: tpu_custom_call.1
$region0: #{tpu_custom_call.1}
  #allocation0 [shape = 'u32[]', space=smem, size = 0x4, offset = 0x4, fixed_abs, tag = 'smem constant byte address 0x4 - core index']
  #allocation1 [shape = 'u32[144,128]{1,0:T(1,128)}', space=vmem, size = 0x12000, scoped, tag = 'internal scratch']
  #allocation2 [shape = 'bf16[512,1024]{1,0:T(16,128)(2,1)}', space=vmem, size = 0x100000, scoped, tag = 'scratch operand']
  #allocation3 [shape = 'bf16[1024,256]{1,0:T(16,128)(2,1)}', space=vmem, size = 0x80000, scoped, tag = 'scratch operand']
  #allocation4 [shape = 's32[2]{0}', space=sflag, size = 0x8, scoped, tag = 'scratch operand']
  #allocation18 [shape = 's32[]', space=sflag, size = 0x4, offset = 0, fixed_abs, tag = 'sflag constant byte address 0x0 - dummy sync flag']
  #allocation20 [shape = 's32[]', space=sflag, size = 0x4, offset = 0, fixed_abs, tag = 'sflag constant byte address 0x0 - dummy sync flag']
  %s0 = inlined_call_operand.hbm [shape: f32[8,32], index: 0, kind: input, shape index: {}]
  %s1 = inlined_call_operand.hbm [shape: bf16[32,128], index: 1, kind: input, shape index: {}]
  %s2 = inlined_call_operand.vmem [shape: f32[1,128], index: 2, kind: input, shape index: {}]
  %s3 = inlined_call_operand.hbm [shape: bf16[128,256], index: 3, kind: input, shape index: {}]
  %s4 = inlined_call_operand.hbm [shape: f32[1,256], index: 4, kind: input, shape index: {}]
  %s5 = inlined_call_operand.hbm [shape: f32[1,256], index: 5, kind: input, shape index: {}]
  %s6 = inlined_call_operand.hbm [shape: f32[1,256], index: 6, kind: input, shape index: {}]
  %s7 = inlined_call_operand.hbm [shape: bf16[256,512], index: 7, kind: input, shape index: {}]
  %s8 = inlined_call_operand.vmem [shape: f32[1,512], index: 8, kind: input, shape index: {}]
  %s9 = inlined_call_operand.vmem [shape: f32[1,512], index: 9, kind: input, shape index: {}]
  %s10 = inlined_call_operand.vmem [shape: f32[1,512], index: 10, kind: input, shape index: {}]
  %s11 = inlined_call_operand.hbm [shape: bf16[512,1024], index: 11, kind: input, shape index: {}]
  %s12 = inlined_call_operand.vmem [shape: f32[1,1024], index: 12, kind: input, shape index: {}]
  %s13 = inlined_call_operand.vmem [shape: f32[1,1024], index: 13, kind: input, shape index: {}]
  %s14 = inlined_call_operand.vmem [shape: f32[1,1024], index: 14, kind: input, shape index: {}]
  %s15 = inlined_call_operand.hbm [shape: bf16[1024,256], index: 15, kind: input, shape index: {}]
  %s16 = inlined_call_operand.vmem [shape: f32[1,256], index: 16, kind: input, shape index: {}]
  %s17 = inlined_call_operand.hbm [shape: f32[8,256], index: 17, kind: output, shape index: {}]
  %s18 = sld [smem:[#allocation0]]
  $region98: #{tpu_custom_call.1} parent=0
    _
  %s20 = ssub.s32 1, %s18
  %s21 = scalar_select 0, %s20, %s18
  $region1: #{tpu_custom_call.1} parent=0
    #allocation5 [shape = 'u8[4096]{0}', space=vmem, size = 0x1000, scoped, tag = 'input window, operand 0, single buffered']
    #allocation6 [shape = 's32[1]{0}', space=sflag, size = 0x4, scoped, tag = 'scoped memory for tpu_custom_call.1']
    #allocation7 [shape = 's32[1]{0}', space=sflag, size = 0x4, scoped, tag = 'scoped memory for tpu_custom_call.1']
    #allocation8 [shape = 'u8[8192]{0}', space=vmem, size = 0x2000, scoped, tag = 'input window, operand 1, single buffered']
    #allocation9 [shape = 's32[1]{0}', space=sflag, size = 0x4, scoped, tag = 'scoped memory for tpu_custom_call.1']
    #allocation10 [shape = 'u8[65536]{0}', space=vmem, size = 0x10000, scoped, tag = 'input window, operand 3, single buffered']
    #allocation11 [shape = 'u8[1024]{0}', space=vmem, size = 0x400, scoped, tag = 'input window, operand 4, single buffered']
    #allocation12 [shape = 's32[1]{0}', space=sflag, size = 0x4, scoped, tag = 'scoped memory for tpu_custom_call.1']
    #allocation13 [shape = 'u8[1024]{0}', space=vmem, size = 0x400, scoped, tag = 'input window, operand 5, single buffered']
    #allocation14 [shape = 'u8[1024]{0}', space=vmem, size = 0x400, scoped, tag = 'input window, operand 6, single buffered']
    #allocation15 [shape = 's32[1]{0}', space=sflag, size = 0x4, scoped, tag = 'scoped memory for tpu_custom_call.1']
    #allocation16 [shape = 'u8[262144]{0}', space=vmem, size = 0x40000, scoped, tag = 'input window, operand 7, single buffered']
    #allocation17 [shape = 'u8[8192]{0}', space=vmem, size = 0x2000, scoped, tag = 'output window, operand 0, single buffered']
    #allocation19 [shape = 'u32[9]{0}', space=smem, size = 0x24, scoped, tag = 'DMA stride descriptor']
    #allocation21 [shape = 'u32[9]{0}', space=smem, size = 0x24, scoped, tag = 'DMA stride descriptor']
    %22 = vsyncpa [#allocation6], 0
    %23 = vsyncpa [#allocation9], 0
    %24 = vsyncpa [#allocation12], 0
    %25 = vsyncpa [#allocation15], 0
    %26 = vsyncpa [#allocation7], 0
    // Predicated region
    $region2: #{tpu_custom_call.1} parent=1 // pred_check
      _
    $region3: #{tpu_custom_call.1} parent=1 // pred_check_branch
      %28 = sbr.rel (0) target = $region5
    $region4: #{tpu_custom_call.1} parent=1 // pred_region
      %s30 = ssub.s32 128, 128
      %31 = vsyncadd [#allocation6], %s30
      %s33 = sshll.u32 [#allocation5], 4
      %s34 = int_to_ptr.vmem [resolvable:$true] %s33
      %36 = dma.hbm_to_vmem [thread:$0]  %s0, 128, %s34, [#allocation6]
    $region5: #{tpu_custom_call.1} parent=1 // pred_fallthru
      _
    // Predicated region
    $region6: #{tpu_custom_call.1} parent=1 // pred_check
      _
    $region7: #{tpu_custom_call.1} parent=1 // pred_check_branch
      %38 = sbr.rel (0) target = $region9
    $region8: #{tpu_custom_call.1} parent=1 // pred_region
      %s40 = ssub.s32 256, 256
      %41 = vsyncadd [#allocation9], %s40
      %s42 = sshll.u32 [#allocation8], 4
      %s43 = int_to_ptr.vmem [resolvable:$true] %s42
      %48 = dma.hbm_to_vmem [thread:$0]  %s1, 256, %s43, [#allocation9], 64, 64, 4
    $region9: #{tpu_custom_call.1} parent=1 // pred_fallthru
      _
    // Predicated region
    $region10: #{tpu_custom_call.1} parent=1 // pred_check
      _
    $region11: #{tpu_custom_call.1} parent=1 // pred_check_branch
      %50 = sbr.rel (0) target = $region13
    $region12: #{tpu_custom_call.1} parent=1 // pred_region
      _
    $region13: #{tpu_custom_call.1} parent=1 // pred_fallthru
      _
    // Predicated region
    $region14: #{tpu_custom_call.1} parent=1 // pred_check
      _
    $region15: #{tpu_custom_call.1} parent=1 // pred_check_branch
      %52 = sbr.rel (0) target = $region17
    $region16: #{tpu_custom_call.1} parent=1 // pred_region
      %s54 = ssub.s32 2048, 2048
      %55 = vsyncadd [#allocation9], %s54
      %s56 = sshll.u32 [#allocation10], 4
      %s57 = int_to_ptr.vmem [resolvable:$true] %s56
      %62 = dma.hbm_to_vmem [thread:$0]  %s3, 2048, %s57, [#allocation9], 128, 128, 8
    $region17: #{tpu_custom_call.1} parent=1 // pred_fallthru
      _
    // Predicated region
    $region18: #{tpu_custom_call.1} parent=1 // pred_check
      _
    $region19: #{tpu_custom_call.1} parent=1 // pred_check_branch
      %64 = sbr.rel (0) target = $region21
    $region20: #{tpu_custom_call.1} parent=1 // pred_region
      %s66 = ssub.s32 32, 32
      %67 = vsyncadd [#allocation12], %s66
      %s69 = sshll.u32 [#allocation11], 4
      %s70 = int_to_ptr.vmem [resolvable:$true] %s69
      %72 = dma.hbm_to_vmem [thread:$0]  %s4, 32, %s70, [#allocation12]
    $region21: #{tpu_custom_call.1} parent=1 // pred_fallthru
      _
    // Predicated region
    $region22: #{tpu_custom_call.1} parent=1 // pred_check
      _
    $region23: #{tpu_custom_call.1} parent=1 // pred_check_branch
      %74 = sbr.rel (0) target = $region25
    $region24: #{tpu_custom_call.1} parent=1 // pred_region
      %s76 = ssub.s32 32, 32
      %77 = vsyncadd [#allocation12], %s76
      %s79 = sshll.u32 [#allocation13], 4
      %s80 = int_to_ptr.vmem [resolvable:$true] %s79
      %82 = dma.hbm_to_vmem [thread:$0]  %s5, 32, %s80, [#allocation12]
    $region25: #{tpu_custom_call.1} parent=1 // pred_fallthru
      _
    // Predicated region
    $region26: #{tpu_custom_call.1} parent=1 // pred_check
      _
    $region27: #{tpu_custom_call.1} parent=1 // pred_check_branch
      %84 = sbr.rel (0) target = $region29
    $region28: #{tpu_custom_call.1} parent=1 // pred_region
      %s86 = ssub.s32 32, 32
      %87 = vsyncadd [#allocation15], %s86
      %s89 = sshll.u32 [#allocation14], 4
      %s90 = int_to_ptr.vmem [resolvable:$true] %s89
      %92 = dma.hbm_to_vmem [thread:$0]  %s6, 32, %s90, [#allocation15]
    $region29: #{tpu_custom_call.1} parent=1 // pred_fallthru
      _
    // Predicated region
    $region30: #{tpu_custom_call.1} parent=1 // pred_check
      _
    $region31: #{tpu_custom_call.1} parent=1 // pred_check_branch
      %94 = sbr.rel (0) target = $region33
    $region32: #{tpu_custom_call.1} parent=1 // pred_region
      %s96 = ssub.s32 8192, 8192
      %97 = vsyncadd [#allocation15], %s96
      %s98 = sshll.u32 [#allocation16], 4
      %s99 = int_to_ptr.vmem [resolvable:$true] %s98
      %104 = dma.hbm_to_vmem [thread:$0]  %s7, 8192, %s99, [#allocation15], 256, 256, 16
    $region33: #{tpu_custom_call.1} parent=1 // pred_fallthru
      _
    // Predicated region
    $region34: #{tpu_custom_call.1} parent=1 // pred_check
      _
    $region35: #{tpu_custom_call.1} parent=1 // pred_check_branch
      %106 = sbr.rel (0) target = $region37
    $region36: #{tpu_custom_call.1} parent=1 // pred_region
      _
    $region37: #{tpu_custom_call.1} parent=1 // pred_fallthru
      _
    // Predicated region
    $region38: #{tpu_custom_call.1} parent=1 // pred_check
      _
    $region39: #{tpu_custom_call.1} parent=1 // pred_check_branch
      %108 = sbr.rel (0) target = $region41
    $region40: #{tpu_custom_call.1} parent=1 // pred_region
      _
    $region41: #{tpu_custom_call.1} parent=1 // pred_fallthru
      _
    // Predicated region
    $region42: #{tpu_custom_call.1} parent=1 // pred_check
      _
    $region43: #{tpu_custom_call.1} parent=1 // pred_check_branch
      %110 = sbr.rel (0) target = $region45
    $region44: #{tpu_custom_call.1} parent=1 // pred_region
      _
    $region45: #{tpu_custom_call.1} parent=1 // pred_fallthru
      _
    // Predicated region
    $region46: #{tpu_custom_call.1} parent=1 // pred_check
      _
    $region47: #{tpu_custom_call.1} parent=1 // pred_check_branch
      %112 = sbr.rel (0) target = $region49
    $region48: #{tpu_custom_call.1} parent=1 // pred_region
      _
    $region49: #{tpu_custom_call.1} parent=1 // pred_fallthru
      _
    // Predicated region
    $region50: #{tpu_custom_call.1} parent=1 // pred_check
      _
    $region51: #{tpu_custom_call.1} parent=1 // pred_check_branch
      %114 = sbr.rel (0) target = $region53
    $region52: #{tpu_custom_call.1} parent=1 // pred_region
      _
    $region53: #{tpu_custom_call.1} parent=1 // pred_fallthru
      _
    // Predicated region
    $region54: #{tpu_custom_call.1} parent=1 // pred_check
      _
    $region55: #{tpu_custom_call.1} parent=1 // pred_check_branch
      %116 = sbr.rel (0) target = $region57
    $region56: #{tpu_custom_call.1} parent=1 // pred_region
      _
    $region57: #{tpu_custom_call.1} parent=1 // pred_fallthru
      _
    // Predicated region
    $region58: #{tpu_custom_call.1} parent=1 // pred_check
      _
    $region59: #{tpu_custom_call.1} parent=1 // pred_check_branch
      %118 = sbr.rel (0) target = $region61
    $region60: #{tpu_custom_call.1} parent=1 // pred_region
      _
    $region61: #{tpu_custom_call.1} parent=1 // pred_fallthru
      _
    // Predicated region
    $region62: #{tpu_custom_call.1} parent=1 // pred_check
      _
    $region63: #{tpu_custom_call.1} parent=1 // pred_check_branch
      %120 = sbr.rel (0) target = $region65
    $region64: #{tpu_custom_call.1} parent=1 // pred_region
      %121 = dma.done [#allocation6], 128
    $region65: #{tpu_custom_call.1} parent=1 // pred_fallthru
      _
    // Predicated region
    $region66: #{tpu_custom_call.1} parent=1 // pred_check
      _
    $region67: #{tpu_custom_call.1} parent=1 // pred_check_branch
      %123 = sbr.rel (0) target = $region69
    $region68: #{tpu_custom_call.1} parent=1 // pred_region
      %124 = dma.done [#allocation9], 256
    $region69: #{tpu_custom_call.1} parent=1 // pred_fallthru
      _
    // Predicated region
    $region70: #{tpu_custom_call.1} parent=1 // pred_check
      _
    $region71: #{tpu_custom_call.1} parent=1 // pred_check_branch
      %126 = sbr.rel (0) target = $region73
    $region72: #{tpu_custom_call.1} parent=1 // pred_region
      %127 = dma.done [#allocation9], 2048
    $region73: #{tpu_custom_call.1} parent=1 // pred_fallthru
      _
    // Predicated region
    $region74: #{tpu_custom_call.1} parent=1 // pred_check
      _
    $region75: #{tpu_custom_call.1} parent=1 // pred_check_branch
      %129 = sbr.rel (0) target = $region77
    $region76: #{tpu_custom_call.1} parent=1 // pred_region
      %130 = dma.done [#allocation12], 32
    $region77: #{tpu_custom_call.1} parent=1 // pred_fallthru
      _
    // Predicated region
    $region78: #{tpu_custom_call.1} parent=1 // pred_check
      _
    $region79: #{tpu_custom_call.1} parent=1 // pred_check_branch
      %132 = sbr.rel (0) target = $region81
    $region80: #{tpu_custom_call.1} parent=1 // pred_region
      %133 = dma.done [#allocation12], 32
    $region81: #{tpu_custom_call.1} parent=1 // pred_fallthru
      _
    // Predicated region
    $region82: #{tpu_custom_call.1} parent=1 // pred_check
      _
    $region83: #{tpu_custom_call.1} parent=1 // pred_check_branch
      %135 = sbr.rel (0) target = $region85
    $region84: #{tpu_custom_call.1} parent=1 // pred_region
      %136 = dma.done [#allocation15], 32
    $region85: #{tpu_custom_call.1} parent=1 // pred_fallthru
      _
    // Predicated region
    $region86: #{tpu_custom_call.1} parent=1 // pred_check
      _
    $region87: #{tpu_custom_call.1} parent=1 // pred_check_branch
      %138 = sbr.rel (0) target = $region89
    $region88: #{tpu_custom_call.1} parent=1 // pred_region
      %139 = dma.done [#allocation15], 8192
    $region89: #{tpu_custom_call.1} parent=1 // pred_fallthru
      _
    %s142 = sshll.u32 1, 14
    %s143 = sxor.u32 4294967295, %s142
    %s145 = sld [smem:[#allocation0]]
    %s146 = sadd.s32 2, %s145
    %s148 = sshll.u32 7, 26
    %s149 = sxor.u32 4294967295, %s148
    %s150 = sand.u32 0, %s149
    %s151 = sshll.u32 %s146, 26
    %s152 = sor.u32 %s150, %s151
    %s153 = sshll.u32 [#allocation2], 4
    %s154 = int_to_ptr.vmem [resolvable:$true] %s153
    %157 = sst [smem:[#allocation19]] 1024
    %s158 = scalar_lea.smem [#allocation19], 1
    %159 = sst [smem:[%s158]] 1024
    %s160 = scalar_lea.smem [#allocation19], 2
    %161 = sst [smem:[%s160]] 8
    %s162 = scalar_lea.smem [#allocation19], 3
    %163 = sst [smem:[%s162]] 64
    %s164 = scalar_lea.smem [#allocation19], 4
    %165 = sst [smem:[%s164]] 128
    %s166 = scalar_lea.smem [#allocation19], 5
    %167 = sst [smem:[%s166]] 2
    %s168 = scalar_lea.smem [#allocation19], 6
    %169 = sst [smem:[%s168]] 512
    %s170 = scalar_lea.smem [#allocation19], 7
    %171 = sst [smem:[%s170]] 64
    %s172 = scalar_lea.smem [#allocation19], 8
    %173 = sst [smem:[%s172]] 4
    %175 = dma.general %s11, 32768, %s154, [#allocation4], [#allocation18], [#allocation19], %s152, 0
    %s176 = scalar_lea.sflag [#allocation4], 1
    %s178 = sshll.u32 1, 14
    %s179 = sxor.u32 4294967295, %s178
    %s181 = sadd.s32 2, %s145
    %s183 = sshll.u32 7, 26
    %s184 = sxor.u32 4294967295, %s183
    %s185 = sand.u32 0, %s184
    %s186 = sshll.u32 %s181, 26
    %s187 = sor.u32 %s185, %s186
    %s188 = sshll.u32 [#allocation3], 4
    %s189 = int_to_ptr.vmem [resolvable:$true] %s188
    %192 = sst [smem:[#allocation21]] 256
    %s193 = scalar_lea.smem [#allocation21], 1
    %194 = sst [smem:[%s193]] 256
    %s195 = scalar_lea.smem [#allocation21], 2
    %196 = sst [smem:[%s195]] 2
    %s197 = scalar_lea.smem [#allocation21], 3
    %198 = sst [smem:[%s197]] 64
    %s199 = scalar_lea.smem [#allocation21], 4
    %200 = sst [smem:[%s199]] 128
    %s201 = scalar_lea.smem [#allocation21], 5
    %202 = sst [smem:[%s201]] 2
    %s203 = scalar_lea.smem [#allocation21], 6
    %204 = sst [smem:[%s203]] 128
    %s205 = scalar_lea.smem [#allocation21], 7
    %206 = sst [smem:[%s205]] 64
    %s207 = scalar_lea.smem [#allocation21], 8
    %208 = sst [smem:[%s207]] 4
    %210 = dma.general %s15, 16384, %s189, %s176, [#allocation20], [#allocation21], %s187, 0
    %v211 = vld [vmem:[#allocation5] sm:$0xff]
    %v212 = vld [vmem:[#allocation8] sm:$0xf]
    %v213 = vld [vmem:[#allocation8 + $0x4] sm:$0xf]
    %v214 = vld [vmem:[#allocation8 + $0x8] sm:$0xf]
    %v215 = vld [vmem:[#allocation8 + $0xc] sm:$0xf]
    %v216 = vpack.c.bf16 %v211, %v211
    %v217 = vld [vmem:[%s2] sm:$0x1]
    %v219 = vlaneseq
    %v220 = vshrl.u32 %v219, 7
    %v221 = vsub.s32 0, %v220
    %v222 = vrot.slane %v217, %v221
    %v228 = vunpack.c.l.b16 %v212
    %v229 = vunpack.c.l.b16 %v213
    %v230 = vunpack.c.l.b16 %v214
    %v231 = vunpack.c.l.b16 %v215
    %v232 = vpack.c.b16 %v229, %v228
    %v233 = vpack.c.b16 %v231, %v230
    %vm236 = vcmask 261120
    %v238 = vsel %vm236, %v216, 0
    %240 = vmatprep.subr.bf16.mxu0 0
    %241 = vmatpush1.bf16.msra.mxu0 %v232
    %242 = vmatprep.subr.bf16.mxu0 0
    %243 = vmatpush1.bf16.msra.mxu0 %v233
    %244 = vmatprep.subr.bf16.mxu0 0
    %245 = vmatpush1.bf16.msra.mxu0 0
    %246 = vmatprep.subr.bf16.mxu0 0
    %247 = vmatpush1.bf16.msra.mxu0 0
    %248 = vmatprep.subr.bf16.mxu0 0
    %249 = vmatpush1.bf16.msra.mxu0 0
    %250 = vmatprep.subr.bf16.mxu0 0
    %251 = vmatpush1.bf16.msra.mxu0 0
    %252 = vmatprep.subr.bf16.mxu0 0
    %253 = vmatpush1.bf16.msra.mxu0 0
    %254 = vmatprep.subr.bf16.mxu0 0
    %255 = vmatpush1.bf16.msra.mxu0 0
    %256 = vmatprep.subr.bf16.mxu0 0
    %257 = vmatpush1.bf16.msra.mxu0 0
    %258 = vmatprep.subr.bf16.mxu0 0
    %259 = vmatpush1.bf16.msra.mxu0 0
    %260 = vmatprep.subr.bf16.mxu0 0
    %261 = vmatpush1.bf16.msra.mxu0 0
    %262 = vmatprep.subr.bf16.mxu0 0
    %263 = vmatpush1.bf16.msra.mxu0 0
    %264 = vmatprep.subr.bf16.mxu0 0
    %265 = vmatpush1.bf16.msra.mxu0 0
    %266 = vmatprep.subr.bf16.mxu0 0
    %267 = vmatpush1.bf16.msra.mxu0 0
    %268 = vmatprep.subr.bf16.mxu0 0
    %269 = vmatpush1.bf16.msra.mxu0 0
    %270 = vmatprep.subr.bf16.mxu0 0
    %271 = vmatpush1.bf16.msra.mxu0 0
    %272 = vmatprep.mubr.bf16.mxu0 0
    %273 = vmatmul.mubr.bf16.gmra.mrb[0].mxu0 %v238
    %v274 = vpop.f32.mrb[0].mxu0
    %v275 = vadd.f32 %v222, %v274
    %v276 = vpop.f32.mrb[0].mxu0
    %v277 = vpop.f32.mrb[0].mxu0
    %v278 = vpop.f32.mrb[0].mxu0
    %279 = vdwg.mxu0
    %v280 = vmul.f32 %v275, 0.2
    %v281 = vmax.f32 %v275, %v280
    %v282 = vld [vmem:[#allocation10] sm:$0xff]
    %v283 = vld [vmem:[#allocation10 + $0x8] sm:$0xff]
    %v284 = vld [vmem:[#allocation10 + $0x10] sm:$0xff]
    %v285 = vld [vmem:[#allocation10 + $0x18] sm:$0xff]
    %v286 = vld [vmem:[#allocation10 + $0x20] sm:$0xff]
    %v287 = vld [vmem:[#allocation10 + $0x28] sm:$0xff]
    %v288 = vld [vmem:[#allocation10 + $0x30] sm:$0xff]
    %v289 = vld [vmem:[#allocation10 + $0x38] sm:$0xff]
    %v290 = vld [vmem:[#allocation10 + $0x40] sm:$0xff]
    %v291 = vld [vmem:[#allocation10 + $0x48] sm:$0xff]
    %v292 = vld [vmem:[#allocation10 + $0x50] sm:$0xff]
    %v293 = vld [vmem:[#allocation10 + $0x58] sm:$0xff]
    %v294 = vld [vmem:[#allocation10 + $0x60] sm:$0xff]
    %v295 = vld [vmem:[#allocation10 + $0x68] sm:$0xff]
    %v296 = vld [vmem:[#allocation10 + $0x70] sm:$0xff]
    %v297 = vld [vmem:[#allocation10 + $0x78] sm:$0xff]
    %v298 = vpack.c.bf16 %v281, %v281
    %v299 = vld [vmem:[#allocation11] sm:$0x3]
    %v301 = vlaneseq
    %v302 = vshrl.u32 %v301, 7
    %v303 = vsub.s32 0, %v302
    %v304 = vrot.slane %v299, %v303
    %v305 = vlaneseq
    %v306 = vshrl.u32 %v305, 7
    %v307 = vsub.s32 1, %v306
    %v308 = vrot.slane %v299, %v307
    %v327 = vunpack.c.l.b16 %v282
    %v328 = vunpack.c.h.b16 %v282
    %v329 = vunpack.c.l.b16 %v283
    %v330 = vunpack.c.h.b16 %v283
    %v331 = vunpack.c.l.b16 %v284
    %v332 = vunpack.c.h.b16 %v284
    %v333 = vunpack.c.l.b16 %v285
    %v334 = vunpack.c.h.b16 %v285
    %v335 = vunpack.c.l.b16 %v286
    %v336 = vunpack.c.h.b16 %v286
    %v337 = vunpack.c.l.b16 %v287
    %v338 = vunpack.c.h.b16 %v287
    %v339 = vunpack.c.l.b16 %v288
    %v340 = vunpack.c.h.b16 %v288
    %v341 = vunpack.c.l.b16 %v289
    %v342 = vunpack.c.h.b16 %v289
    %v343 = vunpack.c.l.b16 %v290
    %v344 = vunpack.c.h.b16 %v290
    %v345 = vunpack.c.l.b16 %v291
    %v346 = vunpack.c.h.b16 %v291
    %v347 = vunpack.c.l.b16 %v292
    %v348 = vunpack.c.h.b16 %v292
    %v349 = vunpack.c.l.b16 %v293
    %v350 = vunpack.c.h.b16 %v293
    %v351 = vunpack.c.l.b16 %v294
    %v352 = vunpack.c.h.b16 %v294
    %v353 = vunpack.c.l.b16 %v295
    %v354 = vunpack.c.h.b16 %v295
    %v355 = vunpack.c.l.b16 %v296
    %v356 = vunpack.c.h.b16 %v296
    %v357 = vunpack.c.l.b16 %v297
    %v358 = vunpack.c.h.b16 %v297
    %v359 = vpack.c.b16 %v329, %v327
    %v360 = vpack.c.b16 %v330, %v328
    %v361 = vpack.c.b16 %v333, %v331
    %v362 = vpack.c.b16 %v334, %v332
    %v363 = vpack.c.b16 %v337, %v335
    %v364 = vpack.c.b16 %v338, %v336
    %v365 = vpack.c.b16 %v341, %v339
    %v366 = vpack.c.b16 %v342, %v340
    %v367 = vpack.c.b16 %v345, %v343
    %v368 = vpack.c.b16 %v346, %v344
    %v369 = vpack.c.b16 %v349, %v347
    %v370 = vpack.c.b16 %v350, %v348
    %v371 = vpack.c.b16 %v353, %v351
    %v372 = vpack.c.b16 %v354, %v352
    %v373 = vpack.c.b16 %v357, %v355
    %v374 = vpack.c.b16 %v358, %v356
    %391 = vmatprep.subr.bf16.mxu0 %v360
    %392 = vmatpush1.bf16.msra.mxu0 %v359
    %393 = vmatprep.subr.bf16.mxu0 %v362
    %394 = vmatpush1.bf16.msra.mxu0 %v361
    %395 = vmatprep.subr.bf16.mxu0 %v364
    %396 = vmatpush1.bf16.msra.mxu0 %v363
    %397 = vmatprep.subr.bf16.mxu0 %v366
    %398 = vmatpush1.bf16.msra.mxu0 %v365
    %399 = vmatprep.subr.bf16.mxu0 %v368
    %400 = vmatpush1.bf16.msra.mxu0 %v367
    %401 = vmatprep.subr.bf16.mxu0 %v370
    %402 = vmatpush1.bf16.msra.mxu0 %v369
    %403 = vmatprep.subr.bf16.mxu0 %v372
    %404 = vmatpush1.bf16.msra.mxu0 %v371
    %405 = vmatprep.subr.bf16.mxu0 %v374
    %406 = vmatpush1.bf16.msra.mxu0 %v373
    %407 = vmatprep.subr.bf16.mxu0 0
    %408 = vmatpush1.bf16.msra.mxu0 0
    %409 = vmatprep.subr.bf16.mxu0 0
    %410 = vmatpush1.bf16.msra.mxu0 0
    %411 = vmatprep.subr.bf16.mxu0 0
    %412 = vmatpush1.bf16.msra.mxu0 0
    %413 = vmatprep.subr.bf16.mxu0 0
    %414 = vmatpush1.bf16.msra.mxu0 0
    %415 = vmatprep.subr.bf16.mxu0 0
    %416 = vmatpush1.bf16.msra.mxu0 0
    %417 = vmatprep.subr.bf16.mxu0 0
    %418 = vmatpush1.bf16.msra.mxu0 0
    %419 = vmatprep.subr.bf16.mxu0 0
    %420 = vmatpush1.bf16.msra.mxu0 0
    %421 = vmatprep.subr.bf16.mxu0 0
    %422 = vmatpush1.bf16.msra.mxu0 0
    %423 = vmatprep.mubr.bf16.mxu0 0
    %424 = vmatmul.mubr.bf16.gmra.mrb[0].mxu0 %v298
    %v425 = vpop.f32.mrb[0].mxu0
    %v426 = vadd.f32 %v304, %v425
    %v427 = vpop.f32.mrb[0].mxu0
    %v428 = vadd.f32 %v308, %v427
    %v429 = vpop.f32.mrb[0].mxu0
    %v430 = vpop.f32.mrb[0].mxu0
    %431 = vdwg.mxu0
    %v432 = vrot.slane %v426, 4
    %v433 = vadd.f32 %v426, %v432
    %v434 = vrot.slane %v433, 2
    %v435 = vadd.f32 %v433, %v434
    %v436 = vrot.slane %v435, 1
    %v437 = vadd.f32 %v435, %v436
    %v438 = vrot.slane %v428, 4
    %v439 = vadd.f32 %v428, %v438
    %v440 = vrot.slane %v439, 2
    %v441 = vadd.f32 %v439, %v440
    %v442 = vrot.slane %v441, 1
    %v443 = vadd.f32 %v441, %v442
    %v444 = vrcp.pop 8.0
    %v445 = vmul.f32 %v437, %v444
    %v446 = vmul.f32 %v443, %v444
    %v447 = vmul.f32 %v426, %v426
    %v448 = vmul.f32 %v428, %v428
    %v449 = vrot.slane %v447, 4
    %v450 = vadd.f32 %v447, %v449
    %v451 = vrot.slane %v450, 2
    %v452 = vadd.f32 %v450, %v451
    %v453 = vrot.slane %v452, 1
    %v454 = vadd.f32 %v452, %v453
    %v455 = vrot.slane %v448, 4
    %v456 = vadd.f32 %v448, %v455
    %v457 = vrot.slane %v456, 2
    %v458 = vadd.f32 %v456, %v457
    %v459 = vrot.slane %v458, 1
    %v460 = vadd.f32 %v458, %v459
    %v461 = vmul.f32 %v454, %v444
    %v462 = vmul.f32 %v460, %v444
    %v463 = vmul.f32 %v445, %v445
    %v464 = vmul.f32 %v446, %v446
    %v465 = vsub.f32 %v461, %v463
    %v466 = vsub.f32 %v462, %v464
    %v467 = vmax.f32 %v465, 0.0
    %v468 = vmax.f32 %v466, 0.0
    %v469 = vld [vmem:[#allocation13] sm:$0x3]
    %v470 = vadd.f32 %v467, 0.8
    %v471 = vadd.f32 %v468, 0.8
    %v472 = vrsqrt.pop %v470
    %v473 = vrsqrt.pop %v471
    %v476 = vcombine.low %v472, %v473
    %v478 = vunpack.c.l.s4 1966171168
    %v479 = vunpack.c.0.s8 %v478
    %v480 = vlaneseq
    %v481 = vshrl.u32 %v480, 7
    %v482 = vsub.s32 %v479, %v481
    %v483 = vrot.slane %v476, %v482
    %v485 = vunpack.c.l.s4 1966171168
    %v486 = vunpack.c.0.s8 %v485
    %v487 = vlaneseq
    %v488 = vshrl.u32 %v487, 7
    %v489 = vsub.s32 %v486, %v488
    %v490 = vrot.slane %v483, %v489
    %v492 = vmul.f32 %v469, %v490
    %v493 = vld [vmem:[#allocation14] sm:$0x3]
    %v495 = vlaneseq
    %v496 = vshrl.u32 %v495, 7
    %v497 = vsub.s32 0, %v496
    %v498 = vrot.slane %v492, %v497
    %v499 = vlaneseq
    %v500 = vshrl.u32 %v499, 7
    %v501 = vsub.s32 1, %v500
    %v502 = vrot.slane %v492, %v501
    %v505 = vmul.f32 %v445, %v498
    %v506 = vmul.f32 %v446, %v502
    %v509 = vcombine.low %v505, %v506
    %v511 = vunpack.c.l.s4 1966171168
    %v512 = vunpack.c.0.s8 %v511
    %v513 = vlaneseq
    %v514 = vshrl.u32 %v513, 7
    %v515 = vsub.s32 %v512, %v514
    %v516 = vrot.slane %v509, %v515
    %v518 = vunpack.c.l.s4 1966171168
    %v519 = vunpack.c.0.s8 %v518
    %v520 = vlaneseq
    %v521 = vshrl.u32 %v520, 7
    %v522 = vsub.s32 %v519, %v521
    %v523 = vrot.slane %v516, %v522
    %v525 = vsub.f32 %v493, %v523
    %v526 = vmul.f32 %v426, %v498
    %v527 = vmul.f32 %v428, %v502
    %v529 = vlaneseq
    %v530 = vshrl.u32 %v529, 7
    %v531 = vsub.s32 0, %v530
    %v532 = vrot.slane %v525, %v531
    %v533 = vlaneseq
    %v534 = vshrl.u32 %v533, 7
    %v535 = vsub.s32 1, %v534
    %v536 = vrot.slane %v525, %v535
    %v539 = vadd.f32 %v526, %v532
    %v540 = vadd.f32 %v527, %v536
    %v541 = vmul.f32 %v539, 0.2
    %v542 = vmul.f32 %v540, 0.2
    %v543 = vmax.f32 %v539, %v541
    %v544 = vmax.f32 %v540, %v542
    %v545 = vld [vmem:[#allocation16] sm:$0xff]
    %v546 = vld [vmem:[#allocation16 + $0x8] sm:$0xff]
    %v547 = vld [vmem:[#allocation16 + $0x10] sm:$0xff]
    %v548 = vld [vmem:[#allocation16 + $0x18] sm:$0xff]
    %v549 = vld [vmem:[#allocation16 + $0x20] sm:$0xff]
    %v550 = vld [vmem:[#allocation16 + $0x28] sm:$0xff]
    %v551 = vld [vmem:[#allocation16 + $0x30] sm:$0xff]
    %v552 = vld [vmem:[#allocation16 + $0x38] sm:$0xff]
    %v553 = vld [vmem:[#allocation16 + $0x40] sm:$0xff]
    %v554 = vld [vmem:[#allocation16 + $0x48] sm:$0xff]
    %v555 = vld [vmem:[#allocation16 + $0x50] sm:$0xff]
    %v556 = vld [vmem:[#allocation16 + $0x58] sm:$0xff]
    %v557 = vld [vmem:[#allocation16 + $0x60] sm:$0xff]
    %v558 = vld [vmem:[#allocation16 + $0x68] sm:$0xff]
    %v559 = vld [vmem:[#allocation16 + $0x70] sm:$0xff]
    %v560 = vld [vmem:[#allocation16 + $0x78] sm:$0xff]
    %v561 = vld [vmem:[#allocation16 + $0x80] sm:$0xff]
    %v562 = vld [vmem:[#allocation16 + $0x88] sm:$0xff]
    %v563 = vld [vmem:[#allocation16 + $0x90] sm:$0xff]
    %v564 = vld [vmem:[#allocation16 + $0x98] sm:$0xff]
    %v565 = vld [vmem:[#allocation16 + $0xa0] sm:$0xff]
    %v566 = vld [vmem:[#allocation16 + $0xa8] sm:$0xff]
    %v567 = vld [vmem:[#allocation16 + $0xb0] sm:$0xff]
    %v568 = vld [vmem:[#allocation16 + $0xb8] sm:$0xff]
    %v569 = vld [vmem:[#allocation16 + $0xc0] sm:$0xff]
    %v570 = vld [vmem:[#allocation16 + $0xc8] sm:$0xff]
    %v571 = vld [vmem:[#allocation16 + $0xd0] sm:$0xff]
    %v572 = vld [vmem:[#allocation16 + $0xd8] sm:$0xff]
    %v573 = vld [vmem:[#allocation16 + $0xe0] sm:$0xff]
    %v574 = vld [vmem:[#allocation16 + $0xe8] sm:$0xff]
    %v575 = vld [vmem:[#allocation16 + $0xf0] sm:$0xff]
    %v576 = vld [vmem:[#allocation16 + $0xf8] sm:$0xff]
    %v577 = vld [vmem:[#allocation16 + $0x100] sm:$0xff]
    %v578 = vld [vmem:[#allocation16 + $0x108] sm:$0xff]
    %v579 = vld [vmem:[#allocation16 + $0x110] sm:$0xff]
    %v580 = vld [vmem:[#allocation16 + $0x118] sm:$0xff]
    %v581 = vld [vmem:[#allocation16 + $0x120] sm:$0xff]
    %v582 = vld [vmem:[#allocation16 + $0x128] sm:$0xff]
    %v583 = vld [vmem:[#allocation16 + $0x130] sm:$0xff]
    %v584 = vld [vmem:[#allocation16 + $0x138] sm:$0xff]
    %v585 = vld [vmem:[#allocation16 + $0x140] sm:$0xff]
    %v586 = vld [vmem:[#allocation16 + $0x148] sm:$0xff]
    %v587 = vld [vmem:[#allocation16 + $0x150] sm:$0xff]
    %v588 = vld [vmem:[#allocation16 + $0x158] sm:$0xff]
    %v589 = vld [vmem:[#allocation16 + $0x160] sm:$0xff]
    %v590 = vld [vmem:[#allocation16 + $0x168] sm:$0xff]
    %v591 = vld [vmem:[#allocation16 + $0x170] sm:$0xff]
    %v592 = vld [vmem:[#allocation16 + $0x178] sm:$0xff]
    %v593 = vld [vmem:[#allocation16 + $0x180] sm:$0xff]
    %v594 = vld [vmem:[#allocation16 + $0x188] sm:$0xff]
    %v595 = vld [vmem:[#allocation16 + $0x190] sm:$0xff]
    %v596 = vld [vmem:[#allocation16 + $0x198] sm:$0xff]
    %v597 = vld [vmem:[#allocation16 + $0x1a0] sm:$0xff]
    %v598 = vld [vmem:[#allocation16 + $0x1a8] sm:$0xff]
    %v599 = vld [vmem:[#allocation16 + $0x1b0] sm:$0xff]
    %v600 = vld [vmem:[#allocation16 + $0x1b8] sm:$0xff]
    %v601 = vld [vmem:[#allocation16 + $0x1c0] sm:$0xff]
    %v602 = vld [vmem:[#allocation16 + $0x1c8] sm:$0xff]
    %v603 = vld [vmem:[#allocation16 + $0x1d0] sm:$0xff]
    %v604 = vld [vmem:[#allocation16 + $0x1d8] sm:$0xff]
    %v605 = vld [vmem:[#allocation16 + $0x1e0] sm:$0xff]
    %v606 = vld [vmem:[#allocation16 + $0x1e8] sm:$0xff]
    %v607 = vld [vmem:[#allocation16 + $0x1f0] sm:$0xff]
    %v608 = vld [vmem:[#allocation16 + $0x1f8] sm:$0xff]
    %v609 = vpack.c.bf16 %v543, %v543
    %v610 = vpack.c.bf16 %v544, %v544
    %v611 = vld [vmem:[%s8] sm:$0xf]
    %v613 = vlaneseq
    %v614 = vshrl.u32 %v613, 7
    %v615 = vsub.s32 0, %v614
    %v616 = vrot.slane %v611, %v615
    %v617 = vlaneseq
    %v618 = vshrl.u32 %v617, 7
    %v619 = vsub.s32 1, %v618
    %v620 = vrot.slane %v611, %v619
    %v621 = vlaneseq
    %v622 = vshrl.u32 %v621, 7
    %v623 = vsub.s32 2, %v622
    %v624 = vrot.slane %v611, %v623
    %v625 = vlaneseq
    %v626 = vshrl.u32 %v625, 7
    %v627 = vsub.s32 3, %v626
    %v628 = vrot.slane %v611, %v627
    %v697 = vunpack.c.l.b16 %v545
    %v698 = vunpack.c.h.b16 %v545
    %v699 = vunpack.c.l.b16 %v546
    %v700 = vunpack.c.h.b16 %v546
    %v701 = vunpack.c.l.b16 %v547
    %v702 = vunpack.c.h.b16 %v547
    %v703 = vunpack.c.l.b16 %v548
    %v704 = vunpack.c.h.b16 %v548
    %v705 = vunpack.c.l.b16 %v549
    %v706 = vunpack.c.h.b16 %v549
    %v707 = vunpack.c.l.b16 %v550
    %v708 = vunpack.c.h.b16 %v550
    %v709 = vunpack.c.l.b16 %v551
    %v710 = vunpack.c.h.b16 %v551
    %v711 = vunpack.c.l.b16 %v552
    %v712 = vunpack.c.h.b16 %v552
    %v713 = vunpack.c.l.b16 %v553
    %v714 = vunpack.c.h.b16 %v553
    %v715 = vunpack.c.l.b16 %v554
    %v716 = vunpack.c.h.b16 %v554
    %v717 = vunpack.c.l.b16 %v555
    %v718 = vunpack.c.h.b16 %v555
    %v719 = vunpack.c.l.b16 %v556
    %v720 = vunpack.c.h.b16 %v556
    %v721 = vunpack.c.l.b16 %v557
    %v722 = vunpack.c.h.b16 %v557
    %v723 = vunpack.c.l.b16 %v558
    %v724 = vunpack.c.h.b16 %v558
    %v725 = vunpack.c.l.b16 %v559
    %v726 = vunpack.c.h.b16 %v559
    %v727 = vunpack.c.l.b16 %v560
    %v728 = vunpack.c.h.b16 %v560
    %v729 = vunpack.c.l.b16 %v561
    %v730 = vunpack.c.h.b16 %v561
    %v731 = vunpack.c.l.b16 %v562
    %v732 = vunpack.c.h.b16 %v562
    %v733 = vunpack.c.l.b16 %v563
    %v734 = vunpack.c.h.b16 %v563
    %v735 = vunpack.c.l.b16 %v564
    %v736 = vunpack.c.h.b16 %v564
    %v737 = vunpack.c.l.b16 %v565
    %v738 = vunpack.c.h.b16 %v565
    %v739 = vunpack.c.l.b16 %v566
    %v740 = vunpack.c.h.b16 %v566
    %v741 = vunpack.c.l.b16 %v567
    %v742 = vunpack.c.h.b16 %v567
    %v743 = vunpack.c.l.b16 %v568
    %v744 = vunpack.c.h.b16 %v568
    %v745 = vunpack.c.l.b16 %v569
    %v746 = vunpack.c.h.b16 %v569
    %v747 = vunpack.c.l.b16 %v570
    %v748 = vunpack.c.h.b16 %v570
    %v749 = vunpack.c.l.b16 %v571
    %v750 = vunpack.c.h.b16 %v571
    %v751 = vunpack.c.l.b16 %v572
    %v752 = vunpack.c.h.b16 %v572
    %v753 = vunpack.c.l.b16 %v573
    %v754 = vunpack.c.h.b16 %v573
    %v755 = vunpack.c.l.b16 %v574
    %v756 = vunpack.c.h.b16 %v574
    %v757 = vunpack.c.l.b16 %v575
    %v758 = vunpack.c.h.b16 %v575
    %v759 = vunpack.c.l.b16 %v576
    %v760 = vunpack.c.h.b16 %v576
    %v761 = vunpack.c.l.b16 %v577
    %v762 = vunpack.c.h.b16 %v577
    %v763 = vunpack.c.l.b16 %v578
    %v764 = vunpack.c.h.b16 %v578
    %v765 = vunpack.c.l.b16 %v579
    %v766 = vunpack.c.h.b16 %v579
    %v767 = vunpack.c.l.b16 %v580
    %v768 = vunpack.c.h.b16 %v580
    %v769 = vunpack.c.l.b16 %v581
    %v770 = vunpack.c.h.b16 %v581
    %v771 = vunpack.c.l.b16 %v582
    %v772 = vunpack.c.h.b16 %v582
    %v773 = vunpack.c.l.b16 %v583
    %v774 = vunpack.c.h.b16 %v583
    %v775 = vunpack.c.l.b16 %v584
    %v776 = vunpack.c.h.b16 %v584
    %v777 = vunpack.c.l.b16 %v585
    %v778 = vunpack.c.h.b16 %v585
    %v779 = vunpack.c.l.b16 %v586
    %v780 = vunpack.c.h.b16 %v586
    %v781 = vunpack.c.l.b16 %v587
    %v782 = vunpack.c.h.b16 %v587
    %v783 = vunpack.c.l.b16 %v588
    %v784 = vunpack.c.h.b16 %v588
    %v785 = vunpack.c.l.b16 %v589
    %v786 = vunpack.c.h.b16 %v589
    %v787 = vunpack.c.l.b16 %v590
    %v788 = vunpack.c.h.b16 %v590
    %v789 = vunpack.c.l.b16 %v591
    %v790 = vunpack.c.h.b16 %v591
    %v791 = vunpack.c.l.b16 %v592
    %v792 = vunpack.c.h.b16 %v592
    %v793 = vunpack.c.l.b16 %v593
    %v794 = vunpack.c.h.b16 %v593
    %v795 = vunpack.c.l.b16 %v594
    %v796 = vunpack.c.h.b16 %v594
    %v797 = vunpack.c.l.b16 %v595
    %v798 = vunpack.c.h.b16 %v595
    %v799 = vunpack.c.l.b16 %v596
    %v800 = vunpack.c.h.b16 %v596
    %v801 = vunpack.c.l.b16 %v597
    %v802 = vunpack.c.h.b16 %v597
    %v803 = vunpack.c.l.b16 %v598
    %v804 = vunpack.c.h.b16 %v598
    %v805 = vunpack.c.l.b16 %v599
    %v806 = vunpack.c.h.b16 %v599
    %v807 = vunpack.c.l.b16 %v600
    %v808 = vunpack.c.h.b16 %v600
    %v809 = vunpack.c.l.b16 %v601
    %v810 = vunpack.c.h.b16 %v601
    %v811 = vunpack.c.l.b16 %v602
    %v812 = vunpack.c.h.b16 %v602
    %v813 = vunpack.c.l.b16 %v603
    %v814 = vunpack.c.h.b16 %v603
    %v815 = vunpack.c.l.b16 %v604
    %v816 = vunpack.c.h.b16 %v604
    %v817 = vunpack.c.l.b16 %v605
    %v818 = vunpack.c.h.b16 %v605
    %v819 = vunpack.c.l.b16 %v606
    %v820 = vunpack.c.h.b16 %v606
    %v821 = vunpack.c.l.b16 %v607
    %v822 = vunpack.c.h.b16 %v607
    %v823 = vunpack.c.l.b16 %v608
    %v824 = vunpack.c.h.b16 %v608
    %v825 = vpack.c.b16 %v701, %v697
    %v826 = vpack.c.b16 %v702, %v698
    %v827 = vpack.c.b16 %v703, %v699
    %v828 = vpack.c.b16 %v704, %v700
    %v829 = vpack.c.b16 %v709, %v705
    %v830 = vpack.c.b16 %v710, %v706
    %v831 = vpack.c.b16 %v711, %v707
    %v832 = vpack.c.b16 %v712, %v708
    %v833 = vpack.c.b16 %v717, %v713
    %v834 = vpack.c.b16 %v718, %v714
    %v835 = vpack.c.b16 %v719, %v715
    %v836 = vpack.c.b16 %v720, %v716
    %v837 = vpack.c.b16 %v725, %v721
    %v838 = vpack.c.b16 %v726, %v722
    %v839 = vpack.c.b16 %v727, %v723
    %v840 = vpack.c.b16 %v728, %v724
    %v841 = vpack.c.b16 %v733, %v729
    %v842 = vpack.c.b16 %v734, %v730
    %v843 = vpack.c.b16 %v735, %v731
    %v844 = vpack.c.b16 %v736, %v732
    %v845 = vpack.c.b16 %v741, %v737
    %v846 = vpack.c.b16 %v742, %v738
    %v847 = vpack.c.b16 %v743, %v739
    %v848 = vpack.c.b16 %v744, %v740
    %v849 = vpack.c.b16 %v749, %v745
    %v850 = vpack.c.b16 %v750, %v746
    %v851 = vpack.c.b16 %v751, %v747
    %v852 = vpack.c.b16 %v752, %v748
    %v853 = vpack.c.b16 %v757, %v753
    %v854 = vpack.c.b16 %v758, %v754
    %v855 = vpack.c.b16 %v759, %v755
    %v856 = vpack.c.b16 %v760, %v756
    %v857 = vpack.c.b16 %v765, %v761
    %v858 = vpack.c.b16 %v766, %v762
    %v859 = vpack.c.b16 %v767, %v763
    %v860 = vpack.c.b16 %v768, %v764
    %v861 = vpack.c.b16 %v773, %v769
    %v862 = vpack.c.b16 %v774, %v770
    %v863 = vpack.c.b16 %v775, %v771
    %v864 = vpack.c.b16 %v776, %v772
    %v865 = vpack.c.b16 %v781, %v777
    %v866 = vpack.c.b16 %v782, %v778
    %v867 = vpack.c.b16 %v783, %v779
    %v868 = vpack.c.b16 %v784, %v780
    %v869 = vpack.c.b16 %v789, %v785
    %v870 = vpack.c.b16 %v790, %v786
    %v871 = vpack.c.b16 %v791, %v787
    %v872 = vpack.c.b16 %v792, %v788
    %v873 = vpack.c.b16 %v797, %v793
    %v874 = vpack.c.b16 %v798, %v794
    %v875 = vpack.c.b16 %v799, %v795
    %v876 = vpack.c.b16 %v800, %v796
    %v877 = vpack.c.b16 %v805, %v801
    %v878 = vpack.c.b16 %v806, %v802
    %v879 = vpack.c.b16 %v807, %v803
    %v880 = vpack.c.b16 %v808, %v804
    %v881 = vpack.c.b16 %v813, %v809
    %v882 = vpack.c.b16 %v814, %v810
    %v883 = vpack.c.b16 %v815, %v811
    %v884 = vpack.c.b16 %v816, %v812
    %v885 = vpack.c.b16 %v821, %v817
    %v886 = vpack.c.b16 %v822, %v818
    %v887 = vpack.c.b16 %v823, %v819
    %v888 = vpack.c.b16 %v824, %v820
    %953 = vmatprep.subr.bf16.mxu0 %v826
    %954 = vmatpush1.bf16.msra.mxu0 %v825
    %955 = vmatprep.subr.bf16.mxu0 %v830
    %956 = vmatpush1.bf16.msra.mxu0 %v829
    %957 = vmatprep.subr.bf16.mxu0 %v834
    %958 = vmatpush1.bf16.msra.mxu0 %v833
    %959 = vmatprep.subr.bf16.mxu0 %v838
    %960 = vmatpush1.bf16.msra.mxu0 %v837
    %961 = vmatprep.subr.bf16.mxu0 %v842
    %962 = vmatpush1.bf16.msra.mxu0 %v841
    %963 = vmatprep.subr.bf16.mxu0 %v846
    %964 = vmatpush1.bf16.msra.mxu0 %v845
    %965 = vmatprep.subr.bf16.mxu0 %v850
    %966 = vmatpush1.bf16.msra.mxu0 %v849
    %967 = vmatprep.subr.bf16.mxu0 %v854
    %968 = vmatpush1.bf16.msra.mxu0 %v853
    %969 = vmatprep.subr.bf16.mxu0 %v858
    %970 = vmatpush1.bf16.msra.mxu0 %v857
    %971 = vmatprep.subr.bf16.mxu0 %v862
    %972 = vmatpush1.bf16.msra.mxu0 %v861
    %973 = vmatprep.subr.bf16.mxu0 %v866
    %974 = vmatpush1.bf16.msra.mxu0 %v865
    %975 = vmatprep.subr.bf16.mxu0 %v870
    %976 = vmatpush1.bf16.msra.mxu0 %v869
    %977 = vmatprep.subr.bf16.mxu0 %v874
    %978 = vmatpush1.bf16.msra.mxu0 %v873
    %979 = vmatprep.subr.bf16.mxu0 %v878
    %980 = vmatpush1.bf16.msra.mxu0 %v877
    %981 = vmatprep.subr.bf16.mxu0 %v882
    %982 = vmatpush1.bf16.msra.mxu0 %v881
    %983 = vmatprep.subr.bf16.mxu0 %v886
    %984 = vmatpush1.bf16.msra.mxu0 %v885
    %985 = vmatprep.mubr.bf16.mxu0 %v610
    %986 = vmatmul.mubr.bf16.gmra.mrb[0].mxu0 %v609
    %v987 = vpop.f32.mrb[0].mxu0
    %v988 = vadd.f32 %v616, %v987
    %v989 = vpop.f32.mrb[0].mxu0
    %v990 = vadd.f32 %v620, %v989
    %v991 = vpop.f32.mrb[0].mxu0
    %v992 = vpop.f32.mrb[0].mxu0
    %993 = vdwg.mxu0
    %994 = vmatprep.subr.bf16.mxu0 %v828
    %995 = vmatpush1.bf16.msra.mxu0 %v827
    %996 = vmatprep.subr.bf16.mxu0 %v832
    %997 = vmatpush1.bf16.msra.mxu0 %v831
    %998 = vmatprep.subr.bf16.mxu0 %v836
    %999 = vmatpush1.bf16.msra.mxu0 %v835
    %1000 = vmatprep.subr.bf16.mxu0 %v840
    %1001 = vmatpush1.bf16.msra.mxu0 %v839
    %1002 = vmatprep.subr.bf16.mxu0 %v844
    %1003 = vmatpush1.bf16.msra.mxu0 %v843
    %1004 = vmatprep.subr.bf16.mxu0 %v848
    %1005 = vmatpush1.bf16.msra.mxu0 %v847
    %1006 = vmatprep.subr.bf16.mxu0 %v852
    %1007 = vmatpush1.bf16.msra.mxu0 %v851
    %1008 = vmatprep.subr.bf16.mxu0 %v856
    %1009 = vmatpush1.bf16.msra.mxu0 %v855
    %1010 = vmatprep.subr.bf16.mxu0 %v860
    %1011 = vmatpush1.bf16.msra.mxu0 %v859
    %1012 = vmatprep.subr.bf16.mxu0 %v864
    %1013 = vmatpush1.bf16.msra.mxu0 %v863
    %1014 = vmatprep.subr.bf16.mxu0 %v868
    %1015 = vmatpush1.bf16.msra.mxu0 %v867
    %1016 = vmatprep.subr.bf16.mxu0 %v872
    %1017 = vmatpush1.bf16.msra.mxu0 %v871
    %1018 = vmatprep.subr.bf16.mxu0 %v876
    %1019 = vmatpush1.bf16.msra.mxu0 %v875
    %1020 = vmatprep.subr.bf16.mxu0 %v880
    %1021 = vmatpush1.bf16.msra.mxu0 %v879
    %1022 = vmatprep.subr.bf16.mxu0 %v884
    %1023 = vmatpush1.bf16.msra.mxu0 %v883
    %1024 = vmatprep.subr.bf16.mxu0 %v888
    %1025 = vmatpush1.bf16.msra.mxu0 %v887
    %1026 = vmatprep.mubr.bf16.mxu0 %v610
    %1027 = vmatmul.mubr.bf16.gmra.mrb[0].mxu0 %v609
    %v1028 = vpop.f32.mrb[0].mxu0
    %v1029 = vadd.f32 %v624, %v1028
    %v1030 = vpop.f32.mrb[0].mxu0
    %v1031 = vadd.f32 %v628, %v1030
    %v1032 = vpop.f32.mrb[0].mxu0
    %v1033 = vpop.f32.mrb[0].mxu0
    %1034 = vdwg.mxu0
    %v1035 = vrot.slane %v988, 4
    %v1036 = vadd.f32 %v988, %v1035
    %v1037 = vrot.slane %v1036, 2
    %v1038 = vadd.f32 %v1036, %v1037
    %v1039 = vrot.slane %v1038, 1
    %v1040 = vadd.f32 %v1038, %v1039
    %v1041 = vrot.slane %v990, 4
    %v1042 = vadd.f32 %v990, %v1041
    %v1043 = vrot.slane %v1042, 2
    %v1044 = vadd.f32 %v1042, %v1043
    %v1045 = vrot.slane %v1044, 1
    %v1046 = vadd.f32 %v1044, %v1045
    %v1047 = vrot.slane %v1029, 4
    %v1048 = vadd.f32 %v1029, %v1047
    %v1049 = vrot.slane %v1048, 2
    %v1050 = vadd.f32 %v1048, %v1049
    %v1051 = vrot.slane %v1050, 1
    %v1052 = vadd.f32 %v1050, %v1051
    %v1053 = vrot.slane %v1031, 4
    %v1054 = vadd.f32 %v1031, %v1053
    %v1055 = vrot.slane %v1054, 2
    %v1056 = vadd.f32 %v1054, %v1055
    %v1057 = vrot.slane %v1056, 1
    %v1058 = vadd.f32 %v1056, %v1057
    %v1059 = vmul.f32 %v1040, %v444
    %v1060 = vmul.f32 %v1046, %v444
    %v1061 = vmul.f32 %v1052, %v444
    %v1062 = vmul.f32 %v1058, %v444
    %v1063 = vmul.f32 %v988, %v988
    %v1064 = vmul.f32 %v990, %v990
    %v1065 = vmul.f32 %v1029, %v1029
    %v1066 = vmul.f32 %v1031, %v1031
    %v1067 = vrot.slane %v1063, 4
    %v1068 = vadd.f32 %v1063, %v1067
    %v1069 = vrot.slane %v1068, 2
    %v1070 = vadd.f32 %v1068, %v1069
    %v1071 = vrot.slane %v1070, 1
    %v1072 = vadd.f32 %v1070, %v1071
    %v1073 = vrot.slane %v1064, 4
    %v1074 = vadd.f32 %v1064, %v1073
    %v1075 = vrot.slane %v1074, 2
    %v1076 = vadd.f32 %v1074, %v1075
    %v1077 = vrot.slane %v1076, 1
    %v1078 = vadd.f32 %v1076, %v1077
    %v1079 = vrot.slane %v1065, 4
    %v1080 = vadd.f32 %v1065, %v1079
    %v1081 = vrot.slane %v1080, 2
    %v1082 = vadd.f32 %v1080, %v1081
    %v1083 = vrot.slane %v1082, 1
    %v1084 = vadd.f32 %v1082, %v1083
    %v1085 = vrot.slane %v1066, 4
    %v1086 = vadd.f32 %v1066, %v1085
    %v1087 = vrot.slane %v1086, 2
    %v1088 = vadd.f32 %v1086, %v1087
    %v1089 = vrot.slane %v1088, 1
    %v1090 = vadd.f32 %v1088, %v1089
    %v1091 = vmul.f32 %v1072, %v444
    %v1092 = vmul.f32 %v1078, %v444
    %v1093 = vmul.f32 %v1084, %v444
    %v1094 = vmul.f32 %v1090, %v444
    %v1095 = vmul.f32 %v1059, %v1059
    %v1096 = vmul.f32 %v1060, %v1060
    %v1097 = vmul.f32 %v1061, %v1061
    %v1098 = vmul.f32 %v1062, %v1062
    %v1099 = vsub.f32 %v1091, %v1095
    %v1100 = vsub.f32 %v1092, %v1096
    %v1101 = vsub.f32 %v1093, %v1097
    %v1102 = vsub.f32 %v1094, %v1098
    %v1103 = vmax.f32 %v1099, 0.0
    %v1104 = vmax.f32 %v1100, 0.0
    %v1105 = vmax.f32 %v1101, 0.0
    %v1106 = vmax.f32 %v1102, 0.0
    %v1107 = vld [vmem:[%s9] sm:$0xf]
    %v1108 = vadd.f32 %v1103, 0.8
    %v1109 = vadd.f32 %v1104, 0.8
    %v1110 = vadd.f32 %v1105, 0.8
    %v1111 = vadd.f32 %v1106, 0.8
    %v1112 = vrsqrt.pop %v1108
    %v1113 = vrsqrt.pop %v1109
    %v1114 = vrsqrt.pop %v1110
    %v1115 = vrsqrt.pop %v1111
    %v1120 = vcombine.low %v1112, %v1113
    %v1121 = vcombine.low %v1114, %v1115
    %v1123 = vunpack.c.l.s4 1966171168
    %v1124 = vunpack.c.0.s8 %v1123
    %v1125 = vlaneseq
    %v1126 = vshrl.u32 %v1125, 7
    %v1127 = vsub.s32 %v1124, %v1126
    %v1128 = vrot.slane %v1120, %v1127
    %v1130 = vunpack.c.l.s4 1966171168
    %v1131 = vunpack.c.0.s8 %v1130
    %v1132 = vlaneseq
    %v1133 = vshrl.u32 %v1132, 7
    %v1134 = vsub.s32 %v1131, %v1133
    %v1135 = vrot.slane %v1121, %v1134
    %v1136 = vcombine.low %v1128, %v1135
    %v1138 = vunpack.c.l.s4 1966171168
    %v1139 = vunpack.c.0.s8 %v1138
    %v1140 = vlaneseq
    %v1141 = vshrl.u32 %v1140, 7
    %v1142 = vsub.s32 %v1139, %v1141
    %v1143 = vrot.slane %v1136, %v1142
    %v1145 = vmul.f32 %v1107, %v1143
    %v1146 = vld [vmem:[%s10] sm:$0xf]
    %v1148 = vlaneseq
    %v1149 = vshrl.u32 %v1148, 7
    %v1150 = vsub.s32 0, %v1149
    %v1151 = vrot.slane %v1145, %v1150
    %v1152 = vlaneseq
    %v1153 = vshrl.u32 %v1152, 7
    %v1154 = vsub.s32 1, %v1153
    %v1155 = vrot.slane %v1145, %v1154
    %v1156 = vlaneseq
    %v1157 = vshrl.u32 %v1156, 7
    %v1158 = vsub.s32 2, %v1157
    %v1159 = vrot.slane %v1145, %v1158
    %v1160 = vlaneseq
    %v1161 = vshrl.u32 %v1160, 7
    %v1162 = vsub.s32 3, %v1161
    %v1163 = vrot.slane %v1145, %v1162
    %v1168 = vmul.f32 %v1059, %v1151
    %v1169 = vmul.f32 %v1060, %v1155
    %v1170 = vmul.f32 %v1061, %v1159
    %v1171 = vmul.f32 %v1062, %v1163
    %v1176 = vcombine.low %v1168, %v1169
    %v1177 = vcombine.low %v1170, %v1171
    %v1179 = vunpack.c.l.s4 1966171168
    %v1180 = vunpack.c.0.s8 %v1179
    %v1181 = vlaneseq
    %v1182 = vshrl.u32 %v1181, 7
    %v1183 = vsub.s32 %v1180, %v1182
    %v1184 = vrot.slane %v1176, %v1183
    %v1186 = vunpack.c.l.s4 1966171168
    %v1187 = vunpack.c.0.s8 %v1186
    %v1188 = vlaneseq
    %v1189 = vshrl.u32 %v1188, 7
    %v1190 = vsub.s32 %v1187, %v1189
    %v1191 = vrot.slane %v1177, %v1190
    %v1192 = vcombine.low %v1184, %v1191
    %v1194 = vunpack.c.l.s4 1966171168
    %v1195 = vunpack.c.0.s8 %v1194
    %v1196 = vlaneseq
    %v1197 = vshrl.u32 %v1196, 7
    %v1198 = vsub.s32 %v1195, %v1197
    %v1199 = vrot.slane %v1192, %v1198
    %v1201 = vsub.f32 %v1146, %v1199
    %v1202 = vmul.f32 %v988, %v1151
    %v1203 = vmul.f32 %v990, %v1155
    %v1204 = vmul.f32 %v1029, %v1159
    %v1205 = vmul.f32 %v1031, %v1163
    %v1207 = vlaneseq
    %v1208 = vshrl.u32 %v1207, 7
    %v1209 = vsub.s32 0, %v1208
    %v1210 = vrot.slane %v1201, %v1209
    %v1211 = vlaneseq
    %v1212 = vshrl.u32 %v1211, 7
    %v1213 = vsub.s32 1, %v1212
    %v1214 = vrot.slane %v1201, %v1213
    %v1215 = vlaneseq
    %v1216 = vshrl.u32 %v1215, 7
    %v1217 = vsub.s32 2, %v1216
    %v1218 = vrot.slane %v1201, %v1217
    %v1219 = vlaneseq
    %v1220 = vshrl.u32 %v1219, 7
    %v1221 = vsub.s32 3, %v1220
    %v1222 = vrot.slane %v1201, %v1221
    %v1227 = vadd.f32 %v1202, %v1210
    %v1228 = vadd.f32 %v1203, %v1214
    %v1229 = vadd.f32 %v1204, %v1218
    %v1230 = vadd.f32 %v1205, %v1222
    %v1231 = vmul.f32 %v1227, 0.2
    %v1232 = vmul.f32 %v1228, 0.2
    %v1233 = vmul.f32 %v1229, 0.2
    %v1234 = vmul.f32 %v1230, 0.2
    %v1235 = vmax.f32 %v1227, %v1231
    %v1236 = vmax.f32 %v1228, %v1232
    %v1237 = vmax.f32 %v1229, %v1233
    %v1238 = vmax.f32 %v1230, %v1234
    %s1239 = smul.u32 4, 64
    %s1240 = smul.u32 %s1239, 8
    %s1241 = sshll.u32 %s1240, 4
    %1242 = dma.done [#allocation4], %s1241
    %v1243 = vld [vmem:[#allocation2] sm:$0xff]
    %v1244 = vld [vmem:[#allocation2 + $0x8] sm:$0xff]
    %v1245 = vld [vmem:[#allocation2 + $0x10] sm:$0xff]
    %v1246 = vld [vmem:[#allocation2 + $0x18] sm:$0xff]
    %v1247 = vld [vmem:[#allocation2 + $0x20] sm:$0xff]
    %v1248 = vld [vmem:[#allocation2 + $0x28] sm:$0xff]
    %v1249 = vld [vmem:[#allocation2 + $0x30] sm:$0xff]
    %v1250 = vld [vmem:[#allocation2 + $0x38] sm:$0xff]
    %v1251 = vld [vmem:[#allocation2 + $0x40] sm:$0xff]
    %v1252 = vld [vmem:[#allocation2 + $0x48] sm:$0xff]
    %v1253 = vld [vmem:[#allocation2 + $0x50] sm:$0xff]
    %v1254 = vld [vmem:[#allocation2 + $0x58] sm:$0xff]
    %v1255 = vld [vmem:[#allocation2 + $0x60] sm:$0xff]
    %v1256 = vld [vmem:[#allocation2 + $0x68] sm:$0xff]
    %v1257 = vld [vmem:[#allocation2 + $0x70] sm:$0xff]
    %v1258 = vld [vmem:[#allocation2 + $0x78] sm:$0xff]
    %v1259 = vld [vmem:[#allocation2 + $0x80] sm:$0xff]
    %v1260 = vld [vmem:[#allocation2 + $0x88] sm:$0xff]
    %v1261 = vld [vmem:[#allocation2 + $0x90] sm:$0xff]
    %v1262 = vld [vmem:[#allocation2 + $0x98] sm:$0xff]
    %v1263 = vld [vmem:[#allocation2 + $0xa0] sm:$0xff]
    %v1264 = vld [vmem:[#allocation2 + $0xa8] sm:$0xff]
    %v1265 = vld [vmem:[#allocation2 + $0xb0] sm:$0xff]
    %v1266 = vld [vmem:[#allocation2 + $0xb8] sm:$0xff]
    %v1267 = vld [vmem:[#allocation2 + $0xc0] sm:$0xff]
    %v1268 = vld [vmem:[#allocation2 + $0xc8] sm:$0xff]
    %v1269 = vld [vmem:[#allocation2 + $0xd0] sm:$0xff]
    %v1270 = vld [vmem:[#allocation2 + $0xd8] sm:$0xff]
    %v1271 = vld [vmem:[#allocation2 + $0xe0] sm:$0xff]
    %v1272 = vld [vmem:[#allocation2 + $0xe8] sm:$0xff]
    %v1273 = vld [vmem:[#allocation2 + $0xf0] sm:$0xff]
    %v1274 = vld [vmem:[#allocation2 + $0xf8] sm:$0xff]
    %v1275 = vld [vmem:[#allocation2 + $0x100] sm:$0xff]
    %v1276 = vld [vmem:[#allocation2 + $0x108] sm:$0xff]
    %v1277 = vld [vmem:[#allocation2 + $0x110] sm:$0xff]
    %v1278 = vld [vmem:[#allocation2 + $0x118] sm:$0xff]
    %v1279 = vld [vmem:[#allocation2 + $0x120] sm:$0xff]
    %v1280 = vld [vmem:[#allocation2 + $0x128] sm:$0xff]
    %v1281 = vld [vmem:[#allocation2 + $0x130] sm:$0xff]
    %v1282 = vld [vmem:[#allocation2 + $0x138] sm:$0xff]
    %v1283 = vld [vmem:[#allocation2 + $0x140] sm:$0xff]
    %v1284 = vld [vmem:[#allocation2 + $0x148] sm:$0xff]
    %v1285 = vld [vmem:[#allocation2 + $0x150] sm:$0xff]
    %v1286 = vld [vmem:[#allocation2 + $0x158] sm:$0xff]
    %v1287 = vld [vmem:[#allocation2 + $0x160] sm:$0xff]
    %v1288 = vld [vmem:[#allocation2 + $0x168] sm:$0xff]
    %v1289 = vld [vmem:[#allocation2 + $0x170] sm:$0xff]
    %v1290 = vld [vmem:[#allocation2 + $0x178] sm:$0xff]
    %v1291 = vld [vmem:[#allocation2 + $0x180] sm:$0xff]
    %v1292 = vld [vmem:[#allocation2 + $0x188] sm:$0xff]
    %v1293 = vld [vmem:[#allocation2 + $0x190] sm:$0xff]
    %v1294 = vld [vmem:[#allocation2 + $0x198] sm:$0xff]
    %v1295 = vld [vmem:[#allocation2 + $0x1a0] sm:$0xff]
    %v1296 = vld [vmem:[#allocation2 + $0x1a8] sm:$0xff]
    %v1297 = vld [vmem:[#allocation2 + $0x1b0] sm:$0xff]
    %v1298 = vld [vmem:[#allocation2 + $0x1b8] sm:$0xff]
    %v1299 = vld [vmem:[#allocation2 + $0x1c0] sm:$0xff]
    %v1300 = vld [vmem:[#allocation2 + $0x1c8] sm:$0xff]
    %v1301 = vld [vmem:[#allocation2 + $0x1d0] sm:$0xff]
    %v1302 = vld [vmem:[#allocation2 + $0x1d8] sm:$0xff]
    %v1303 = vld [vmem:[#allocation2 + $0x1e0] sm:$0xff]
    %v1304 = vld [vmem:[#allocation2 + $0x1e8] sm:$0xff]
    %v1305 = vld [vmem:[#allocation2 + $0x1f0] sm:$0xff]
    %v1306 = vld [vmem:[#allocation2 + $0x1f8] sm:$0xff]
    %v1307 = vld [vmem:[#allocation2 + $0x200] sm:$0xff]
    %v1308 = vld [vmem:[#allocation2 + $0x208] sm:$0xff]
    %v1309 = vld [vmem:[#allocation2 + $0x210] sm:$0xff]
    %v1310 = vld [vmem:[#allocation2 + $0x218] sm:$0xff]
    %v1311 = vld [vmem:[#allocation2 + $0x220] sm:$0xff]
    %v1312 = vld [vmem:[#allocation2 + $0x228] sm:$0xff]
    %v1313 = vld [vmem:[#allocation2 + $0x230] sm:$0xff]
    %v1314 = vld [vmem:[#allocation2 + $0x238] sm:$0xff]
    %v1315 = vld [vmem:[#allocation2 + $0x240] sm:$0xff]
    %v1316 = vld [vmem:[#allocation2 + $0x248] sm:$0xff]
    %v1317 = vld [vmem:[#allocation2 + $0x250] sm:$0xff]
    %v1318 = vld [vmem:[#allocation2 + $0x258] sm:$0xff]
    %v1319 = vld [vmem:[#allocation2 + $0x260] sm:$0xff]
    %v1320 = vld [vmem:[#allocation2 + $0x268] sm:$0xff]
    %v1321 = vld [vmem:[#allocation2 + $0x270] sm:$0xff]
    %v1322 = vld [vmem:[#allocation2 + $0x278] sm:$0xff]
    %v1323 = vld [vmem:[#allocation2 + $0x280] sm:$0xff]
    %v1324 = vld [vmem:[#allocation2 + $0x288] sm:$0xff]
    %v1325 = vld [vmem:[#allocation2 + $0x290] sm:$0xff]
    %v1326 = vld [vmem:[#allocation2 + $0x298] sm:$0xff]
    %v1327 = vld [vmem:[#allocation2 + $0x2a0] sm:$0xff]
    %v1328 = vld [vmem:[#allocation2 + $0x2a8] sm:$0xff]
    %v1329 = vld [vmem:[#allocation2 + $0x2b0] sm:$0xff]
    %v1330 = vld [vmem:[#allocation2 + $0x2b8] sm:$0xff]
    %v1331 = vld [vmem:[#allocation2 + $0x2c0] sm:$0xff]
    %v1332 = vld [vmem:[#allocation2 + $0x2c8] sm:$0xff]
    %v1333 = vld [vmem:[#allocation2 + $0x2d0] sm:$0xff]
    %v1334 = vld [vmem:[#allocation2 + $0x2d8] sm:$0xff]
    %v1335 = vld [vmem:[#allocation2 + $0x2e0] sm:$0xff]
    %v1336 = vld [vmem:[#allocation2 + $0x2e8] sm:$0xff]
    %v1337 = vld [vmem:[#allocation2 + $0x2f0] sm:$0xff]
    %v1338 = vld [vmem:[#allocation2 + $0x2f8] sm:$0xff]
    %v1339 = vld [vmem:[#allocation2 + $0x300] sm:$0xff]
    %v1340 = vld [vmem:[#allocation2 + $0x308] sm:$0xff]
    %v1341 = vld [vmem:[#allocation2 + $0x310] sm:$0xff]
    %v1342 = vld [vmem:[#allocation2 + $0x318] sm:$0xff]
    %v1343 = vld [vmem:[#allocation2 + $0x320] sm:$0xff]
    %v1344 = vld [vmem:[#allocation2 + $0x328] sm:$0xff]
    %v1345 = vld [vmem:[#allocation2 + $0x330] sm:$0xff]
    %v1346 = vld [vmem:[#allocation2 + $0x338] sm:$0xff]
    %v1347 = vld [vmem:[#allocation2 + $0x340] sm:$0xff]
    %v1348 = vld [vmem:[#allocation2 + $0x348] sm:$0xff]
    %v1349 = vld [vmem:[#allocation2 + $0x350] sm:$0xff]
    %v1350 = vld [vmem:[#allocation2 + $0x358] sm:$0xff]
    %v1351 = vld [vmem:[#allocation2 + $0x360] sm:$0xff]
    %v1352 = vld [vmem:[#allocation2 + $0x368] sm:$0xff]
    %v1353 = vld [vmem:[#allocation2 + $0x370] sm:$0xff]
    %v1354 = vld [vmem:[#allocation2 + $0x378] sm:$0xff]
    %v1355 = vld [vmem:[#allocation2 + $0x380] sm:$0xff]
    %v1356 = vld [vmem:[#allocation2 + $0x388] sm:$0xff]
    %v1357 = vld [vmem:[#allocation2 + $0x390] sm:$0xff]
    %v1358 = vld [vmem:[#allocation2 + $0x398] sm:$0xff]
    %v1359 = vld [vmem:[#allocation2 + $0x3a0] sm:$0xff]
    %v1360 = vld [vmem:[#allocation2 + $0x3a8] sm:$0xff]
    %v1361 = vld [vmem:[#allocation2 + $0x3b0] sm:$0xff]
    %v1362 = vld [vmem:[#allocation2 + $0x3b8] sm:$0xff]
    %v1363 = vld [vmem:[#allocation2 + $0x3c0] sm:$0xff]
    %v1364 = vld [vmem:[#allocation2 + $0x3c8] sm:$0xff]
    %v1365 = vld [vmem:[#allocation2 + $0x3d0] sm:$0xff]
    %v1366 = vld [vmem:[#allocation2 + $0x3d8] sm:$0xff]
    %v1367 = vld [vmem:[#allocation2 + $0x3e0] sm:$0xff]
    %v1368 = vld [vmem:[#allocation2 + $0x3e8] sm:$0xff]
    %v1369 = vld [vmem:[#allocation2 + $0x3f0] sm:$0xff]
    %v1370 = vld [vmem:[#allocation2 + $0x3f8] sm:$0xff]
    %v1371 = vld [vmem:[#allocation2 + $0x400] sm:$0xff]
    %v1372 = vld [vmem:[#allocation2 + $0x408] sm:$0xff]
    %v1373 = vld [vmem:[#allocation2 + $0x410] sm:$0xff]
    %v1374 = vld [vmem:[#allocation2 + $0x418] sm:$0xff]
    %v1375 = vld [vmem:[#allocation2 + $0x420] sm:$0xff]
    %v1376 = vld [vmem:[#allocation2 + $0x428] sm:$0xff]
    %v1377 = vld [vmem:[#allocation2 + $0x430] sm:$0xff]
    %v1378 = vld [vmem:[#allocation2 + $0x438] sm:$0xff]
    %v1379 = vld [vmem:[#allocation2 + $0x440] sm:$0xff]
    %v1380 = vld [vmem:[#allocation2 + $0x448] sm:$0xff]
    %v1381 = vld [vmem:[#allocation2 + $0x450] sm:$0xff]
    %v1382 = vld [vmem:[#allocation2 + $0x458] sm:$0xff]
    %v1383 = vld [vmem:[#allocation2 + $0x460] sm:$0xff]
    %v1384 = vld [vmem:[#allocation2 + $0x468] sm:$0xff]
    %v1385 = vld [vmem:[#allocation2 + $0x470] sm:$0xff]
    %v1386 = vld [vmem:[#allocation2 + $0x478] sm:$0xff]
    %v1387 = vld [vmem:[#allocation2 + $0x480] sm:$0xff]
    %v1388 = vld [vmem:[#allocation2 + $0x488] sm:$0xff]
    %v1389 = vld [vmem:[#allocation2 + $0x490] sm:$0xff]
    %v1390 = vld [vmem:[#allocation2 + $0x498] sm:$0xff]
    %v1391 = vld [vmem:[#allocation2 + $0x4a0] sm:$0xff]
    %v1392 = vld [vmem:[#allocation2 + $0x4a8] sm:$0xff]
    %v1393 = vld [vmem:[#allocation2 + $0x4b0] sm:$0xff]
    %v1394 = vld [vmem:[#allocation2 + $0x4b8] sm:$0xff]
    %v1395 = vld [vmem:[#allocation2 + $0x4c0] sm:$0xff]
    %v1396 = vld [vmem:[#allocation2 + $0x4c8] sm:$0xff]
    %v1397 = vld [vmem:[#allocation2 + $0x4d0] sm:$0xff]
    %v1398 = vld [vmem:[#allocation2 + $0x4d8] sm:$0xff]
    %v1399 = vld [vmem:[#allocation2 + $0x4e0] sm:$0xff]
    %v1400 = vld [vmem:[#allocation2 + $0x4e8] sm:$0xff]
    %v1401 = vld [vmem:[#allocation2 + $0x4f0] sm:$0xff]
    %v1402 = vld [vmem:[#allocation2 + $0x4f8] sm:$0xff]
    %v1403 = vld [vmem:[#allocation2 + $0x500] sm:$0xff]
    %v1404 = vld [vmem:[#allocation2 + $0x508] sm:$0xff]
    %v1405 = vld [vmem:[#allocation2 + $0x510] sm:$0xff]
    %v1406 = vld [vmem:[#allocation2 + $0x518] sm:$0xff]
    %v1407 = vld [vmem:[#allocation2 + $0x520] sm:$0xff]
    %v1408 = vld [vmem:[#allocation2 + $0x528] sm:$0xff]
    %v1409 = vld [vmem:[#allocation2 + $0x530] sm:$0xff]
    %v1410 = vld [vmem:[#allocation2 + $0x538] sm:$0xff]
    %v1411 = vld [vmem:[#allocation2 + $0x540] sm:$0xff]
    %v1412 = vld [vmem:[#allocation2 + $0x548] sm:$0xff]
    %v1413 = vld [vmem:[#allocation2 + $0x550] sm:$0xff]
    %v1414 = vld [vmem:[#allocation2 + $0x558] sm:$0xff]
    %v1415 = vld [vmem:[#allocation2 + $0x560] sm:$0xff]
    %v1416 = vld [vmem:[#allocation2 + $0x568] sm:$0xff]
    %v1417 = vld [vmem:[#allocation2 + $0x570] sm:$0xff]
    %v1418 = vld [vmem:[#allocation2 + $0x578] sm:$0xff]
    %v1419 = vld [vmem:[#allocation2 + $0x580] sm:$0xff]
    %v1420 = vld [vmem:[#allocation2 + $0x588] sm:$0xff]
    %v1421 = vld [vmem:[#allocation2 + $0x590] sm:$0xff]
    %v1422 = vld [vmem:[#allocation2 + $0x598] sm:$0xff]
    %v1423 = vld [vmem:[#allocation2 + $0x5a0] sm:$0xff]
    %v1424 = vld [vmem:[#allocation2 + $0x5a8] sm:$0xff]
    %v1425 = vld [vmem:[#allocation2 + $0x5b0] sm:$0xff]
    %v1426 = vld [vmem:[#allocation2 + $0x5b8] sm:$0xff]
    %v1427 = vld [vmem:[#allocation2 + $0x5c0] sm:$0xff]
    %v1428 = vld [vmem:[#allocation2 + $0x5c8] sm:$0xff]
    %v1429 = vld [vmem:[#allocation2 + $0x5d0] sm:$0xff]
    %v1430 = vld [vmem:[#allocation2 + $0x5d8] sm:$0xff]
    %v1431 = vld [vmem:[#allocation2 + $0x5e0] sm:$0xff]
    %v1432 = vld [vmem:[#allocation2 + $0x5e8] sm:$0xff]
    %v1433 = vld [vmem:[#allocation2 + $0x5f0] sm:$0xff]
    %v1434 = vld [vmem:[#allocation2 + $0x5f8] sm:$0xff]
    %v1435 = vld [vmem:[#allocation2 + $0x600] sm:$0xff]
    %v1436 = vld [vmem:[#allocation2 + $0x608] sm:$0xff]
    %v1437 = vld [vmem:[#allocation2 + $0x610] sm:$0xff]
    %v1438 = vld [vmem:[#allocation2 + $0x618] sm:$0xff]
    %v1439 = vld [vmem:[#allocation2 + $0x620] sm:$0xff]
    %v1440 = vld [vmem:[#allocation2 + $0x628] sm:$0xff]
    %v1441 = vld [vmem:[#allocation2 + $0x630] sm:$0xff]
    %v1442 = vld [vmem:[#allocation2 + $0x638] sm:$0xff]
    %v1443 = vld [vmem:[#allocation2 + $0x640] sm:$0xff]
    %v1444 = vld [vmem:[#allocation2 + $0x648] sm:$0xff]
    %v1445 = vld [vmem:[#allocation2 + $0x650] sm:$0xff]
    %v1446 = vld [vmem:[#allocation2 + $0x658] sm:$0xff]
    %v1447 = vld [vmem:[#allocation2 + $0x660] sm:$0xff]
    %v1448 = vld [vmem:[#allocation2 + $0x668] sm:$0xff]
    %v1449 = vld [vmem:[#allocation2 + $0x670] sm:$0xff]
    %v1450 = vld [vmem:[#allocation2 + $0x678] sm:$0xff]
    %v1451 = vld [vmem:[#allocation2 + $0x680] sm:$0xff]
    %v1452 = vld [vmem:[#allocation2 + $0x688] sm:$0xff]
    %v1453 = vld [vmem:[#allocation2 + $0x690] sm:$0xff]
    %v1454 = vld [vmem:[#allocation2 + $0x698] sm:$0xff]
    %v1455 = vld [vmem:[#allocation2 + $0x6a0] sm:$0xff]
    %v1456 = vld [vmem:[#allocation2 + $0x6a8] sm:$0xff]
    %v1457 = vld [vmem:[#allocation2 + $0x6b0] sm:$0xff]
    %v1458 = vld [vmem:[#allocation2 + $0x6b8] sm:$0xff]
    %v1459 = vld [vmem:[#allocation2 + $0x6c0] sm:$0xff]
    %v1460 = vld [vmem:[#allocation2 + $0x6c8] sm:$0xff]
    %v1461 = vld [vmem:[#allocation2 + $0x6d0] sm:$0xff]
    %v1462 = vld [vmem:[#allocation2 + $0x6d8] sm:$0xff]
    %v1463 = vld [vmem:[#allocation2 + $0x6e0] sm:$0xff]
    %v1464 = vld [vmem:[#allocation2 + $0x6e8] sm:$0xff]
    %v1465 = vld [vmem:[#allocation2 + $0x6f0] sm:$0xff]
    %v1466 = vld [vmem:[#allocation2 + $0x6f8] sm:$0xff]
    %v1467 = vld [vmem:[#allocation2 + $0x700] sm:$0xff]
    %v1468 = vld [vmem:[#allocation2 + $0x708] sm:$0xff]
    %v1469 = vld [vmem:[#allocation2 + $0x710] sm:$0xff]
    %v1470 = vld [vmem:[#allocation2 + $0x718] sm:$0xff]
    %v1471 = vld [vmem:[#allocation2 + $0x720] sm:$0xff]
    %v1472 = vld [vmem:[#allocation2 + $0x728] sm:$0xff]
    %v1473 = vld [vmem:[#allocation2 + $0x730] sm:$0xff]
    %v1474 = vld [vmem:[#allocation2 + $0x738] sm:$0xff]
    %v1475 = vld [vmem:[#allocation2 + $0x740] sm:$0xff]
    %v1476 = vld [vmem:[#allocation2 + $0x748] sm:$0xff]
    %v1477 = vld [vmem:[#allocation2 + $0x750] sm:$0xff]
    %v1478 = vld [vmem:[#allocation2 + $0x758] sm:$0xff]
    %v1479 = vld [vmem:[#allocation2 + $0x760] sm:$0xff]
    %v1480 = vld [vmem:[#allocation2 + $0x768] sm:$0xff]
    %v1481 = vld [vmem:[#allocation2 + $0x770] sm:$0xff]
    %v1482 = vld [vmem:[#allocation2 + $0x778] sm:$0xff]
    %v1483 = vld [vmem:[#allocation2 + $0x780] sm:$0xff]
    %v1484 = vld [vmem:[#allocation2 + $0x788] sm:$0xff]
    %v1485 = vld [vmem:[#allocation2 + $0x790] sm:$0xff]
    %v1486 = vld [vmem:[#allocation2 + $0x798] sm:$0xff]
    %v1487 = vld [vmem:[#allocation2 + $0x7a0] sm:$0xff]
    %v1488 = vld [vmem:[#allocation2 + $0x7a8] sm:$0xff]
    %v1489 = vld [vmem:[#allocation2 + $0x7b0] sm:$0xff]
    %v1490 = vld [vmem:[#allocation2 + $0x7b8] sm:$0xff]
    %v1491 = vld [vmem:[#allocation2 + $0x7c0] sm:$0xff]
    %v1492 = vld [vmem:[#allocation2 + $0x7c8] sm:$0xff]
    %v1493 = vld [vmem:[#allocation2 + $0x7d0] sm:$0xff]
    %v1494 = vld [vmem:[#allocation2 + $0x7d8] sm:$0xff]
    %v1495 = vld [vmem:[#allocation2 + $0x7e0] sm:$0xff]
    %v1496 = vld [vmem:[#allocation2 + $0x7e8] sm:$0xff]
    %v1497 = vld [vmem:[#allocation2 + $0x7f0] sm:$0xff]
    %v1498 = vld [vmem:[#allocation2 + $0x7f8] sm:$0xff]
    %v1499 = vpack.c.bf16 %v1235, %v1235
    %v1500 = vpack.c.bf16 %v1236, %v1236
    %v1501 = vpack.c.bf16 %v1237, %v1237
    %v1502 = vpack.c.bf16 %v1238, %v1238
    %v1503 = vld [vmem:[%s12] sm:$0xff]
    %v1505 = vlaneseq
    %v1506 = vshrl.u32 %v1505, 7
    %v1507 = vsub.s32 0, %v1506
    %v1508 = vrot.slane %v1503, %v1507
    %v1509 = vlaneseq
    %v1510 = vshrl.u32 %v1509, 7
    %v1511 = vsub.s32 1, %v1510
    %v1512 = vrot.slane %v1503, %v1511
    %v1513 = vlaneseq
    %v1514 = vshrl.u32 %v1513, 7
    %v1515 = vsub.s32 2, %v1514
    %v1516 = vrot.slane %v1503, %v1515
    %v1517 = vlaneseq
    %v1518 = vshrl.u32 %v1517, 7
    %v1519 = vsub.s32 3, %v1518
    %v1520 = vrot.slane %v1503, %v1519
    %v1521 = vlaneseq
    %v1522 = vshrl.u32 %v1521, 7
    %v1523 = vsub.s32 4, %v1522
    %v1524 = vrot.slane %v1503, %v1523
    %v1525 = vlaneseq
    %v1526 = vshrl.u32 %v1525, 7
    %v1527 = vsub.s32 5, %v1526
    %v1528 = vrot.slane %v1503, %v1527
    %v1529 = vlaneseq
    %v1530 = vshrl.u32 %v1529, 7
    %v1531 = vsub.s32 6, %v1530
    %v1532 = vrot.slane %v1503, %v1531
    %v1533 = vlaneseq
    %v1534 = vshrl.u32 %v1533, 7
    %v1535 = vsub.s32 7, %v1534
    %v1536 = vrot.slane %v1503, %v1535
    %1545 = vmatprep.subr.bf16.mxu0 %v1244
    %1546 = vmatpush1.bf16.msra.mxu0 %v1243
    %1547 = vmatprep.subr.bf16.mxu0 %v1252
    %1548 = vmatpush1.bf16.msra.mxu0 %v1251
    %1549 = vmatprep.subr.bf16.mxu0 %v1260
    %1550 = vmatpush1.bf16.msra.mxu0 %v1259
    %1551 = vmatprep.subr.bf16.mxu0 %v1268
    %1552 = vmatpush1.bf16.msra.mxu0 %v1267
    %1553 = vmatprep.subr.bf16.mxu0 %v1276
    %1554 = vmatpush1.bf16.msra.mxu0 %v1275
    %1555 = vmatprep.subr.bf16.mxu0 %v1284
    %1556 = vmatpush1.bf16.msra.mxu0 %v1283
    %1557 = vmatprep.subr.bf16.mxu0 %v1292
    %1558 = vmatpush1.bf16.msra.mxu0 %v1291
    %1559 = vmatprep.subr.bf16.mxu0 %v1300
    %1560 = vmatpush1.bf16.msra.mxu0 %v1299
    %1561 = vmatprep.subr.bf16.mxu0 %v1308
    %1562 = vmatpush1.bf16.msra.mxu0 %v1307
    %1563 = vmatprep.subr.bf16.mxu0 %v1316
    %1564 = vmatpush1.bf16.msra.mxu0 %v1315
    %1565 = vmatprep.subr.bf16.mxu0 %v1324
    %1566 = vmatpush1.bf16.msra.mxu0 %v1323
    %1567 = vmatprep.subr.bf16.mxu0 %v1332
    %1568 = vmatpush1.bf16.msra.mxu0 %v1331
    %1569 = vmatprep.subr.bf16.mxu0 %v1340
    %1570 = vmatpush1.bf16.msra.mxu0 %v1339
    %1571 = vmatprep.subr.bf16.mxu0 %v1348
    %1572 = vmatpush1.bf16.msra.mxu0 %v1347
    %1573 = vmatprep.subr.bf16.mxu0 %v1356
    %1574 = vmatpush1.bf16.msra.mxu0 %v1355
    %1575 = vmatprep.subr.bf16.mxu0 %v1364
    %1576 = vmatpush1.bf16.msra.mxu0 %v1363
    %1577 = vmatprep.mubr.bf16.mxu0 %v1500
    %1578 = vmatmul.mubr.bf16.gmra.mrb[0].mxu0 %v1499
    %v1579 = vpop.f32.mrb[0].mxu0
    %v1580 = vadd.f32 %v1508, %v1579
    %v1581 = vpop.f32.mrb[0].mxu0
    %v1582 = vadd.f32 %v1512, %v1581
    %v1583 = vpop.f32.mrb[0].mxu0
    %v1584 = vpop.f32.mrb[0].mxu0
    %1585 = vdwg.mxu0
    %1586 = vmatprep.subr.bf16.mxu0 %v1372
    %1587 = vmatpush1.bf16.msra.mxu0 %v1371
    %1588 = vmatprep.subr.bf16.mxu0 %v1380
    %1589 = vmatpush1.bf16.msra.mxu0 %v1379
    %1590 = vmatprep.subr.bf16.mxu0 %v1388
    %1591 = vmatpush1.bf16.msra.mxu0 %v1387
    %1592 = vmatprep.subr.bf16.mxu0 %v1396
    %1593 = vmatpush1.bf16.msra.mxu0 %v1395
    %1594 = vmatprep.subr.bf16.mxu0 %v1404
    %1595 = vmatpush1.bf16.msra.mxu0 %v1403
    %1596 = vmatprep.subr.bf16.mxu0 %v1412
    %1597 = vmatpush1.bf16.msra.mxu0 %v1411
    %1598 = vmatprep.subr.bf16.mxu0 %v1420
    %1599 = vmatpush1.bf16.msra.mxu0 %v1419
    %1600 = vmatprep.subr.bf16.mxu0 %v1428
    %1601 = vmatpush1.bf16.msra.mxu0 %v1427
    %1602 = vmatprep.subr.bf16.mxu0 %v1436
    %1603 = vmatpush1.bf16.msra.mxu0 %v1435
    %1604 = vmatprep.subr.bf16.mxu0 %v1444
    %1605 = vmatpush1.bf16.msra.mxu0 %v1443
    %1606 = vmatprep.subr.bf16.mxu0 %v1452
    %1607 = vmatpush1.bf16.msra.mxu0 %v1451
    %1608 = vmatprep.subr.bf16.mxu0 %v1460
    %1609 = vmatpush1.bf16.msra.mxu0 %v1459
    %1610 = vmatprep.subr.bf16.mxu0 %v1468
    %1611 = vmatpush1.bf16.msra.mxu0 %v1467
    %1612 = vmatprep.subr.bf16.mxu0 %v1476
    %1613 = vmatpush1.bf16.msra.mxu0 %v1475
    %1614 = vmatprep.subr.bf16.mxu0 %v1484
    %1615 = vmatpush1.bf16.msra.mxu0 %v1483
    %1616 = vmatprep.subr.bf16.mxu0 %v1492
    %1617 = vmatpush1.bf16.msra.mxu0 %v1491
    %1618 = vmatprep.mubr.bf16.mxu0 %v1502
    %1619 = vmatmul.mubr.bf16.gmra.mrb[0].mxu0 %v1501
    %v1620 = vpop.f32.mrb[0].mxu0
    %v1621 = vadd.f32 %v1580, %v1620
    %v1622 = vpop.f32.mrb[0].mxu0
    %v1623 = vadd.f32 %v1582, %v1622
    %v1624 = vpop.f32.mrb[0].mxu0
    %v1625 = vpop.f32.mrb[0].mxu0
    %1626 = vdwg.mxu0
    %1627 = vmatprep.subr.bf16.mxu0 %v1246
    %1628 = vmatpush1.bf16.msra.mxu0 %v1245
    %1629 = vmatprep.subr.bf16.mxu0 %v1254
    %1630 = vmatpush1.bf16.msra.mxu0 %v1253
    %1631 = vmatprep.subr.bf16.mxu0 %v1262
    %1632 = vmatpush1.bf16.msra.mxu0 %v1261
    %1633 = vmatprep.subr.bf16.mxu0 %v1270
    %1634 = vmatpush1.bf16.msra.mxu0 %v1269
    %1635 = vmatprep.subr.bf16.mxu0 %v1278
    %1636 = vmatpush1.bf16.msra.mxu0 %v1277
    %1637 = vmatprep.subr.bf16.mxu0 %v1286
    %1638 = vmatpush1.bf16.msra.mxu0 %v1285
    %1639 = vmatprep.subr.bf16.mxu0 %v1294
    %1640 = vmatpush1.bf16.msra.mxu0 %v1293
    %1641 = vmatprep.subr.bf16.mxu0 %v1302
    %1642 = vmatpush1.bf16.msra.mxu0 %v1301
    %1643 = vmatprep.subr.bf16.mxu0 %v1310
    %1644 = vmatpush1.bf16.msra.mxu0 %v1309
    %1645 = vmatprep.subr.bf16.mxu0 %v1318
    %1646 = vmatpush1.bf16.msra.mxu0 %v1317
    %1647 = vmatprep.subr.bf16.mxu0 %v1326
    %1648 = vmatpush1.bf16.msra.mxu0 %v1325
    %1649 = vmatprep.subr.bf16.mxu0 %v1334
    %1650 = vmatpush1.bf16.msra.mxu0 %v1333
    %1651 = vmatprep.subr.bf16.mxu0 %v1342
    %1652 = vmatpush1.bf16.msra.mxu0 %v1341
    %1653 = vmatprep.subr.bf16.mxu0 %v1350
    %1654 = vmatpush1.bf16.msra.mxu0 %v1349
    %1655 = vmatprep.subr.bf16.mxu0 %v1358
    %1656 = vmatpush1.bf16.msra.mxu0 %v1357
    %1657 = vmatprep.subr.bf16.mxu0 %v1366
    %1658 = vmatpush1.bf16.msra.mxu0 %v1365
    %1659 = vmatprep.mubr.bf16.mxu0 %v1500
    %1660 = vmatmul.mubr.bf16.gmra.mrb[0].mxu0 %v1499
    %v1661 = vpop.f32.mrb[0].mxu0
    %v1662 = vadd.f32 %v1516, %v1661
    %v1663 = vpop.f32.mrb[0].mxu0
    %v1664 = vadd.f32 %v1520, %v1663
    %v1665 = vpop.f32.mrb[0].mxu0
    %v1666 = vpop.f32.mrb[0].mxu0
    %1667 = vdwg.mxu0
    %1668 = vmatprep.subr.bf16.mxu0 %v1374
    %1669 = vmatpush1.bf16.msra.mxu0 %v1373
    %1670 = vmatprep.subr.bf16.mxu0 %v1382
    %1671 = vmatpush1.bf16.msra.mxu0 %v1381
    %1672 = vmatprep.subr.bf16.mxu0 %v1390
    %1673 = vmatpush1.bf16.msra.mxu0 %v1389
    %1674 = vmatprep.subr.bf16.mxu0 %v1398
    %1675 = vmatpush1.bf16.msra.mxu0 %v1397
    %1676 = vmatprep.subr.bf16.mxu0 %v1406
    %1677 = vmatpush1.bf16.msra.mxu0 %v1405
    %1678 = vmatprep.subr.bf16.mxu0 %v1414
    %1679 = vmatpush1.bf16.msra.mxu0 %v1413
    %1680 = vmatprep.subr.bf16.mxu0 %v1422
    %1681 = vmatpush1.bf16.msra.mxu0 %v1421
    %1682 = vmatprep.subr.bf16.mxu0 %v1430
    %1683 = vmatpush1.bf16.msra.mxu0 %v1429
    %1684 = vmatprep.subr.bf16.mxu0 %v1438
    %1685 = vmatpush1.bf16.msra.mxu0 %v1437
    %1686 = vmatprep.subr.bf16.mxu0 %v1446
    %1687 = vmatpush1.bf16.msra.mxu0 %v1445
    %1688 = vmatprep.subr.bf16.mxu0 %v1454
    %1689 = vmatpush1.bf16.msra.mxu0 %v1453
    %1690 = vmatprep.subr.bf16.mxu0 %v1462
    %1691 = vmatpush1.bf16.msra.mxu0 %v1461
    %1692 = vmatprep.subr.bf16.mxu0 %v1470
    %1693 = vmatpush1.bf16.msra.mxu0 %v1469
    %1694 = vmatprep.subr.bf16.mxu0 %v1478
    %1695 = vmatpush1.bf16.msra.mxu0 %v1477
    %1696 = vmatprep.subr.bf16.mxu0 %v1486
    %1697 = vmatpush1.bf16.msra.mxu0 %v1485
    %1698 = vmatprep.subr.bf16.mxu0 %v1494
    %1699 = vmatpush1.bf16.msra.mxu0 %v1493
    %1700 = vmatprep.mubr.bf16.mxu0 %v1502
    %1701 = vmatmul.mubr.bf16.gmra.mrb[0].mxu0 %v1501
    %v1702 = vpop.f32.mrb[0].mxu0
    %v1703 = vadd.f32 %v1662, %v1702
    %v1704 = vpop.f32.mrb[0].mxu0
    %v1705 = vadd.f32 %v1664, %v1704
    %v1706 = vpop.f32.mrb[0].mxu0
    %v1707 = vpop.f32.mrb[0].mxu0
    %1708 = vdwg.mxu0
    %1709 = vmatprep.subr.bf16.mxu0 %v1248
    %1710 = vmatpush1.bf16.msra.mxu0 %v1247
    %1711 = vmatprep.subr.bf16.mxu0 %v1256
    %1712 = vmatpush1.bf16.msra.mxu0 %v1255
    %1713 = vmatprep.subr.bf16.mxu0 %v1264
    %1714 = vmatpush1.bf16.msra.mxu0 %v1263
    %1715 = vmatprep.subr.bf16.mxu0 %v1272
    %1716 = vmatpush1.bf16.msra.mxu0 %v1271
    %1717 = vmatprep.subr.bf16.mxu0 %v1280
    %1718 = vmatpush1.bf16.msra.mxu0 %v1279
    %1719 = vmatprep.subr.bf16.mxu0 %v1288
    %1720 = vmatpush1.bf16.msra.mxu0 %v1287
    %1721 = vmatprep.subr.bf16.mxu0 %v1296
    %1722 = vmatpush1.bf16.msra.mxu0 %v1295
    %1723 = vmatprep.subr.bf16.mxu0 %v1304
    %1724 = vmatpush1.bf16.msra.mxu0 %v1303
    %1725 = vmatprep.subr.bf16.mxu0 %v1312
    %1726 = vmatpush1.bf16.msra.mxu0 %v1311
    %1727 = vmatprep.subr.bf16.mxu0 %v1320
    %1728 = vmatpush1.bf16.msra.mxu0 %v1319
    %1729 = vmatprep.subr.bf16.mxu0 %v1328
    %1730 = vmatpush1.bf16.msra.mxu0 %v1327
    %1731 = vmatprep.subr.bf16.mxu0 %v1336
    %1732 = vmatpush1.bf16.msra.mxu0 %v1335
    %1733 = vmatprep.subr.bf16.mxu0 %v1344
    %1734 = vmatpush1.bf16.msra.mxu0 %v1343
    %1735 = vmatprep.subr.bf16.mxu0 %v1352
    %1736 = vmatpush1.bf16.msra.mxu0 %v1351
    %1737 = vmatprep.subr.bf16.mxu0 %v1360
    %1738 = vmatpush1.bf16.msra.mxu0 %v1359
    %1739 = vmatprep.subr.bf16.mxu0 %v1368
    %1740 = vmatpush1.bf16.msra.mxu0 %v1367
    %1741 = vmatprep.mubr.bf16.mxu0 %v1500
    %1742 = vmatmul.mubr.bf16.gmra.mrb[0].mxu0 %v1499
    %v1743 = vpop.f32.mrb[0].mxu0
    %v1744 = vadd.f32 %v1524, %v1743
    %v1745 = vpop.f32.mrb[0].mxu0
    %v1746 = vadd.f32 %v1528, %v1745
    %v1747 = vpop.f32.mrb[0].mxu0
    %v1748 = vpop.f32.mrb[0].mxu0
    %1749 = vdwg.mxu0
    %1750 = vmatprep.subr.bf16.mxu0 %v1376
    %1751 = vmatpush1.bf16.msra.mxu0 %v1375
    %1752 = vmatprep.subr.bf16.mxu0 %v1384
    %1753 = vmatpush1.bf16.msra.mxu0 %v1383
    %1754 = vmatprep.subr.bf16.mxu0 %v1392
    %1755 = vmatpush1.bf16.msra.mxu0 %v1391
    %1756 = vmatprep.subr.bf16.mxu0 %v1400
    %1757 = vmatpush1.bf16.msra.mxu0 %v1399
    %1758 = vmatprep.subr.bf16.mxu0 %v1408
    %1759 = vmatpush1.bf16.msra.mxu0 %v1407
    %1760 = vmatprep.subr.bf16.mxu0 %v1416
    %1761 = vmatpush1.bf16.msra.mxu0 %v1415
    %1762 = vmatprep.subr.bf16.mxu0 %v1424
    %1763 = vmatpush1.bf16.msra.mxu0 %v1423
    %1764 = vmatprep.subr.bf16.mxu0 %v1432
    %1765 = vmatpush1.bf16.msra.mxu0 %v1431
    %1766 = vmatprep.subr.bf16.mxu0 %v1440
    %1767 = vmatpush1.bf16.msra.mxu0 %v1439
    %1768 = vmatprep.subr.bf16.mxu0 %v1448
    %1769 = vmatpush1.bf16.msra.mxu0 %v1447
    %1770 = vmatprep.subr.bf16.mxu0 %v1456
    %1771 = vmatpush1.bf16.msra.mxu0 %v1455
    %1772 = vmatprep.subr.bf16.mxu0 %v1464
    %1773 = vmatpush1.bf16.msra.mxu0 %v1463
    %1774 = vmatprep.subr.bf16.mxu0 %v1472
    %1775 = vmatpush1.bf16.msra.mxu0 %v1471
    %1776 = vmatprep.subr.bf16.mxu0 %v1480
    %1777 = vmatpush1.bf16.msra.mxu0 %v1479
    %1778 = vmatprep.subr.bf16.mxu0 %v1488
    %1779 = vmatpush1.bf16.msra.mxu0 %v1487
    %1780 = vmatprep.subr.bf16.mxu0 %v1496
    %1781 = vmatpush1.bf16.msra.mxu0 %v1495
    %1782 = vmatprep.mubr.bf16.mxu0 %v1502
    %1783 = vmatmul.mubr.bf16.gmra.mrb[0].mxu0 %v1501
    %v1784 = vpop.f32.mrb[0].mxu0
    %v1785 = vadd.f32 %v1744, %v1784
    %v1786 = vpop.f32.mrb[0].mxu0
    %v1787 = vadd.f32 %v1746, %v1786
    %v1788 = vpop.f32.mrb[0].mxu0
    %v1789 = vpop.f32.mrb[0].mxu0
    %1790 = vdwg.mxu0
    %1791 = vmatprep.subr.bf16.mxu0 %v1250
    %1792 = vmatpush1.bf16.msra.mxu0 %v1249
    %1793 = vmatprep.subr.bf16.mxu0 %v1258
    %1794 = vmatpush1.bf16.msra.mxu0 %v1257
    %1795 = vmatprep.subr.bf16.mxu0 %v1266
    %1796 = vmatpush1.bf16.msra.mxu0 %v1265
    %1797 = vmatprep.subr.bf16.mxu0 %v1274
    %1798 = vmatpush1.bf16.msra.mxu0 %v1273
    %1799 = vmatprep.subr.bf16.mxu0 %v1282
    %1800 = vmatpush1.bf16.msra.mxu0 %v1281
    %1801 = vmatprep.subr.bf16.mxu0 %v1290
    %1802 = vmatpush1.bf16.msra.mxu0 %v1289
    %1803 = vmatprep.subr.bf16.mxu0 %v1298
    %1804 = vmatpush1.bf16.msra.mxu0 %v1297
    %1805 = vmatprep.subr.bf16.mxu0 %v1306
    %1806 = vmatpush1.bf16.msra.mxu0 %v1305
    %1807 = vmatprep.subr.bf16.mxu0 %v1314
    %1808 = vmatpush1.bf16.msra.mxu0 %v1313
    %1809 = vmatprep.subr.bf16.mxu0 %v1322
    %1810 = vmatpush1.bf16.msra.mxu0 %v1321
    %1811 = vmatprep.subr.bf16.mxu0 %v1330
    %1812 = vmatpush1.bf16.msra.mxu0 %v1329
    %1813 = vmatprep.subr.bf16.mxu0 %v1338
    %1814 = vmatpush1.bf16.msra.mxu0 %v1337
    %1815 = vmatprep.subr.bf16.mxu0 %v1346
    %1816 = vmatpush1.bf16.msra.mxu0 %v1345
    %1817 = vmatprep.subr.bf16.mxu0 %v1354
    %1818 = vmatpush1.bf16.msra.mxu0 %v1353
    %1819 = vmatprep.subr.bf16.mxu0 %v1362
    %1820 = vmatpush1.bf16.msra.mxu0 %v1361
    %1821 = vmatprep.subr.bf16.mxu0 %v1370
    %1822 = vmatpush1.bf16.msra.mxu0 %v1369
    %1823 = vmatprep.mubr.bf16.mxu0 %v1500
    %1824 = vmatmul.mubr.bf16.gmra.mrb[0].mxu0 %v1499
    %v1825 = vpop.f32.mrb[0].mxu0
    %v1826 = vadd.f32 %v1532, %v1825
    %v1827 = vpop.f32.mrb[0].mxu0
    %v1828 = vadd.f32 %v1536, %v1827
    %v1829 = vpop.f32.mrb[0].mxu0
    %v1830 = vpop.f32.mrb[0].mxu0
    %1831 = vdwg.mxu0
    %1832 = vmatprep.subr.bf16.mxu0 %v1378
    %1833 = vmatpush1.bf16.msra.mxu0 %v1377
    %1834 = vmatprep.subr.bf16.mxu0 %v1386
    %1835 = vmatpush1.bf16.msra.mxu0 %v1385
    %1836 = vmatprep.subr.bf16.mxu0 %v1394
    %1837 = vmatpush1.bf16.msra.mxu0 %v1393
    %1838 = vmatprep.subr.bf16.mxu0 %v1402
    %1839 = vmatpush1.bf16.msra.mxu0 %v1401
    %1840 = vmatprep.subr.bf16.mxu0 %v1410
    %1841 = vmatpush1.bf16.msra.mxu0 %v1409
    %1842 = vmatprep.subr.bf16.mxu0 %v1418
    %1843 = vmatpush1.bf16.msra.mxu0 %v1417
    %1844 = vmatprep.subr.bf16.mxu0 %v1426
    %1845 = vmatpush1.bf16.msra.mxu0 %v1425
    %1846 = vmatprep.subr.bf16.mxu0 %v1434
    %1847 = vmatpush1.bf16.msra.mxu0 %v1433
    %1848 = vmatprep.subr.bf16.mxu0 %v1442
    %1849 = vmatpush1.bf16.msra.mxu0 %v1441
    %1850 = vmatprep.subr.bf16.mxu0 %v1450
    %1851 = vmatpush1.bf16.msra.mxu0 %v1449
    %1852 = vmatprep.subr.bf16.mxu0 %v1458
    %1853 = vmatpush1.bf16.msra.mxu0 %v1457
    %1854 = vmatprep.subr.bf16.mxu0 %v1466
    %1855 = vmatpush1.bf16.msra.mxu0 %v1465
    %1856 = vmatprep.subr.bf16.mxu0 %v1474
    %1857 = vmatpush1.bf16.msra.mxu0 %v1473
    %1858 = vmatprep.subr.bf16.mxu0 %v1482
    %1859 = vmatpush1.bf16.msra.mxu0 %v1481
    %1860 = vmatprep.subr.bf16.mxu0 %v1490
    %1861 = vmatpush1.bf16.msra.mxu0 %v1489
    %1862 = vmatprep.subr.bf16.mxu0 %v1498
    %1863 = vmatpush1.bf16.msra.mxu0 %v1497
    %1864 = vmatprep.mubr.bf16.mxu0 %v1502
    %1865 = vmatmul.mubr.bf16.gmra.mrb[0].mxu0 %v1501
    %v1866 = vpop.f32.mrb[0].mxu0
    %v1867 = vadd.f32 %v1826, %v1866
    %v1868 = vpop.f32.mrb[0].mxu0
    %v1869 = vadd.f32 %v1828, %v1868
    %v1870 = vpop.f32.mrb[0].mxu0
    %v1871 = vpop.f32.mrb[0].mxu0
    %1872 = vdwg.mxu0
    %v1873 = vrot.slane %v1621, 4
    %v1874 = vadd.f32 %v1621, %v1873
    %v1875 = vrot.slane %v1874, 2
    %v1876 = vadd.f32 %v1874, %v1875
    %v1877 = vrot.slane %v1876, 1
    %v1878 = vadd.f32 %v1876, %v1877
    %v1879 = vrot.slane %v1623, 4
    %v1880 = vadd.f32 %v1623, %v1879
    %v1881 = vrot.slane %v1880, 2
    %v1882 = vadd.f32 %v1880, %v1881
    %v1883 = vrot.slane %v1882, 1
    %v1884 = vadd.f32 %v1882, %v1883
    %v1885 = vrot.slane %v1703, 4
    %v1886 = vadd.f32 %v1703, %v1885
    %v1887 = vrot.slane %v1886, 2
    %v1888 = vadd.f32 %v1886, %v1887
    %v1889 = vrot.slane %v1888, 1
    %v1890 = vadd.f32 %v1888, %v1889
    %v1891 = vrot.slane %v1705, 4
    %v1892 = vadd.f32 %v1705, %v1891
    %v1893 = vrot.slane %v1892, 2
    %v1894 = vadd.f32 %v1892, %v1893
    %v1895 = vrot.slane %v1894, 1
    %v1896 = vadd.f32 %v1894, %v1895
    %v1897 = vrot.slane %v1785, 4
    %v1898 = vadd.f32 %v1785, %v1897
    %v1899 = vrot.slane %v1898, 2
    %v1900 = vadd.f32 %v1898, %v1899
    %v1901 = vrot.slane %v1900, 1
    %v1902 = vadd.f32 %v1900, %v1901
    %v1903 = vrot.slane %v1787, 4
    %v1904 = vadd.f32 %v1787, %v1903
    %v1905 = vrot.slane %v1904, 2
    %v1906 = vadd.f32 %v1904, %v1905
    %v1907 = vrot.slane %v1906, 1
    %v1908 = vadd.f32 %v1906, %v1907
    %v1909 = vrot.slane %v1867, 4
    %v1910 = vadd.f32 %v1867, %v1909
    %v1911 = vrot.slane %v1910, 2
    %v1912 = vadd.f32 %v1910, %v1911
    %v1913 = vrot.slane %v1912, 1
    %v1914 = vadd.f32 %v1912, %v1913
    %v1915 = vrot.slane %v1869, 4
    %v1916 = vadd.f32 %v1869, %v1915
    %v1917 = vrot.slane %v1916, 2
    %v1918 = vadd.f32 %v1916, %v1917
    %v1919 = vrot.slane %v1918, 1
    %v1920 = vadd.f32 %v1918, %v1919
    %v1921 = vmul.f32 %v1878, %v444
    %v1922 = vmul.f32 %v1884, %v444
    %v1923 = vmul.f32 %v1890, %v444
    %v1924 = vmul.f32 %v1896, %v444
    %v1925 = vmul.f32 %v1902, %v444
    %v1926 = vmul.f32 %v1908, %v444
    %v1927 = vmul.f32 %v1914, %v444
    %v1928 = vmul.f32 %v1920, %v444
    %v1929 = vmul.f32 %v1621, %v1621
    %v1930 = vmul.f32 %v1623, %v1623
    %v1931 = vmul.f32 %v1703, %v1703
    %v1932 = vmul.f32 %v1705, %v1705
    %v1933 = vmul.f32 %v1785, %v1785
    %v1934 = vmul.f32 %v1787, %v1787
    %v1935 = vmul.f32 %v1867, %v1867
    %v1936 = vmul.f32 %v1869, %v1869
    %v1937 = vrot.slane %v1929, 4
    %v1938 = vadd.f32 %v1929, %v1937
    %v1939 = vrot.slane %v1938, 2
    %v1940 = vadd.f32 %v1938, %v1939
    %v1941 = vrot.slane %v1940, 1
    %v1942 = vadd.f32 %v1940, %v1941
    %v1943 = vrot.slane %v1930, 4
    %v1944 = vadd.f32 %v1930, %v1943
    %v1945 = vrot.slane %v1944, 2
    %v1946 = vadd.f32 %v1944, %v1945
    %v1947 = vrot.slane %v1946, 1
    %v1948 = vadd.f32 %v1946, %v1947
    %v1949 = vrot.slane %v1931, 4
    %v1950 = vadd.f32 %v1931, %v1949
    %v1951 = vrot.slane %v1950, 2
    %v1952 = vadd.f32 %v1950, %v1951
    %v1953 = vrot.slane %v1952, 1
    %v1954 = vadd.f32 %v1952, %v1953
    %v1955 = vrot.slane %v1932, 4
    %v1956 = vadd.f32 %v1932, %v1955
    %v1957 = vrot.slane %v1956, 2
    %v1958 = vadd.f32 %v1956, %v1957
    %v1959 = vrot.slane %v1958, 1
    %v1960 = vadd.f32 %v1958, %v1959
    %v1961 = vrot.slane %v1933, 4
    %v1962 = vadd.f32 %v1933, %v1961
    %v1963 = vrot.slane %v1962, 2
    %v1964 = vadd.f32 %v1962, %v1963
    %v1965 = vrot.slane %v1964, 1
    %v1966 = vadd.f32 %v1964, %v1965
    %v1967 = vrot.slane %v1934, 4
    %v1968 = vadd.f32 %v1934, %v1967
    %v1969 = vrot.slane %v1968, 2
    %v1970 = vadd.f32 %v1968, %v1969
    %v1971 = vrot.slane %v1970, 1
    %v1972 = vadd.f32 %v1970, %v1971
    %v1973 = vrot.slane %v1935, 4
    %v1974 = vadd.f32 %v1935, %v1973
    %v1975 = vrot.slane %v1974, 2
    %v1976 = vadd.f32 %v1974, %v1975
    %v1977 = vrot.slane %v1976, 1
    %v1978 = vadd.f32 %v1976, %v1977
    %v1979 = vrot.slane %v1936, 4
    %v1980 = vadd.f32 %v1936, %v1979
    %v1981 = vrot.slane %v1980, 2
    %v1982 = vadd.f32 %v1980, %v1981
    %v1983 = vrot.slane %v1982, 1
    %v1984 = vadd.f32 %v1982, %v1983
    %v1985 = vmul.f32 %v1942, %v444
    %v1986 = vmul.f32 %v1948, %v444
    %v1987 = vmul.f32 %v1954, %v444
    %v1988 = vmul.f32 %v1960, %v444
    %v1989 = vmul.f32 %v1966, %v444
    %v1990 = vmul.f32 %v1972, %v444
    %v1991 = vmul.f32 %v1978, %v444
    %v1992 = vmul.f32 %v1984, %v444
    %v1993 = vmul.f32 %v1921, %v1921
    %v1994 = vmul.f32 %v1922, %v1922
    %v1995 = vmul.f32 %v1923, %v1923
    %v1996 = vmul.f32 %v1924, %v1924
    %v1997 = vmul.f32 %v1925, %v1925
    %v1998 = vmul.f32 %v1926, %v1926
    %v1999 = vmul.f32 %v1927, %v1927
    %v2000 = vmul.f32 %v1928, %v1928
    %v2001 = vsub.f32 %v1985, %v1993
    %v2002 = vsub.f32 %v1986, %v1994
    %v2003 = vsub.f32 %v1987, %v1995
    %v2004 = vsub.f32 %v1988, %v1996
    %v2005 = vsub.f32 %v1989, %v1997
    %v2006 = vsub.f32 %v1990, %v1998
    %v2007 = vsub.f32 %v1991, %v1999
    %v2008 = vsub.f32 %v1992, %v2000
    %v2009 = vmax.f32 %v2001, 0.0
    %v2010 = vmax.f32 %v2002, 0.0
    %v2011 = vmax.f32 %v2003, 0.0
    %v2012 = vmax.f32 %v2004, 0.0
    %v2013 = vmax.f32 %v2005, 0.0
    %v2014 = vmax.f32 %v2006, 0.0
    %v2015 = vmax.f32 %v2007, 0.0
    %v2016 = vmax.f32 %v2008, 0.0
    %v2017 = vld [vmem:[%s13] sm:$0xff]
    %v2018 = vadd.f32 %v2009, 0.8
    %v2019 = vadd.f32 %v2010, 0.8
    %v2020 = vadd.f32 %v2011, 0.8
    %v2021 = vadd.f32 %v2012, 0.8
    %v2022 = vadd.f32 %v2013, 0.8
    %v2023 = vadd.f32 %v2014, 0.8
    %v2024 = vadd.f32 %v2015, 0.8
    %v2025 = vadd.f32 %v2016, 0.8
    %v2026 = vrsqrt.pop %v2018
    %v2027 = vrsqrt.pop %v2019
    %v2028 = vrsqrt.pop %v2020
    %v2029 = vrsqrt.pop %v2021
    %v2030 = vrsqrt.pop %v2022
    %v2031 = vrsqrt.pop %v2023
    %v2032 = vrsqrt.pop %v2024
    %v2033 = vrsqrt.pop %v2025
    %v2042 = vcombine.low %v2026, %v2027
    %v2043 = vcombine.low %v2028, %v2029
    %v2044 = vcombine.low %v2030, %v2031
    %v2045 = vcombine.low %v2032, %v2033
    %v2047 = vunpack.c.l.s4 1966171168
    %v2048 = vunpack.c.0.s8 %v2047
    %v2049 = vlaneseq
    %v2050 = vshrl.u32 %v2049, 7
    %v2051 = vsub.s32 %v2048, %v2050
    %v2052 = vrot.slane %v2042, %v2051
    %v2054 = vunpack.c.l.s4 1966171168
    %v2055 = vunpack.c.0.s8 %v2054
    %v2056 = vlaneseq
    %v2057 = vshrl.u32 %v2056, 7
    %v2058 = vsub.s32 %v2055, %v2057
    %v2059 = vrot.slane %v2043, %v2058
    %v2061 = vunpack.c.l.s4 1966171168
    %v2062 = vunpack.c.0.s8 %v2061
    %v2063 = vlaneseq
    %v2064 = vshrl.u32 %v2063, 7
    %v2065 = vsub.s32 %v2062, %v2064
    %v2066 = vrot.slane %v2044, %v2065
    %v2068 = vunpack.c.l.s4 1966171168
    %v2069 = vunpack.c.0.s8 %v2068
    %v2070 = vlaneseq
    %v2071 = vshrl.u32 %v2070, 7
    %v2072 = vsub.s32 %v2069, %v2071
    %v2073 = vrot.slane %v2045, %v2072
    %v2074 = vcombine.low %v2052, %v2059
    %v2075 = vcombine.low %v2066, %v2073
    %v2077 = vunpack.c.l.s4 1966171168
    %v2078 = vunpack.c.0.s8 %v2077
    %v2079 = vlaneseq
    %v2080 = vshrl.u32 %v2079, 7
    %v2081 = vsub.s32 %v2078, %v2080
    %v2082 = vrot.slane %v2074, %v2081
    %v2084 = vunpack.c.l.s4 1966171168
    %v2085 = vunpack.c.0.s8 %v2084
    %v2086 = vlaneseq
    %v2087 = vshrl.u32 %v2086, 7
    %v2088 = vsub.s32 %v2085, %v2087
    %v2089 = vrot.slane %v2075, %v2088
    %v2090 = vcombine.low %v2082, %v2089
    %v2092 = vmul.f32 %v2017, %v2090
    %v2093 = vld [vmem:[%s14] sm:$0xff]
    %v2095 = vlaneseq
    %v2096 = vshrl.u32 %v2095, 7
    %v2097 = vsub.s32 0, %v2096
    %v2098 = vrot.slane %v2092, %v2097
    %v2099 = vlaneseq
    %v2100 = vshrl.u32 %v2099, 7
    %v2101 = vsub.s32 1, %v2100
    %v2102 = vrot.slane %v2092, %v2101
    %v2103 = vlaneseq
    %v2104 = vshrl.u32 %v2103, 7
    %v2105 = vsub.s32 2, %v2104
    %v2106 = vrot.slane %v2092, %v2105
    %v2107 = vlaneseq
    %v2108 = vshrl.u32 %v2107, 7
    %v2109 = vsub.s32 3, %v2108
    %v2110 = vrot.slane %v2092, %v2109
    %v2111 = vlaneseq
    %v2112 = vshrl.u32 %v2111, 7
    %v2113 = vsub.s32 4, %v2112
    %v2114 = vrot.slane %v2092, %v2113
    %v2115 = vlaneseq
    %v2116 = vshrl.u32 %v2115, 7
    %v2117 = vsub.s32 5, %v2116
    %v2118 = vrot.slane %v2092, %v2117
    %v2119 = vlaneseq
    %v2120 = vshrl.u32 %v2119, 7
    %v2121 = vsub.s32 6, %v2120
    %v2122 = vrot.slane %v2092, %v2121
    %v2123 = vlaneseq
    %v2124 = vshrl.u32 %v2123, 7
    %v2125 = vsub.s32 7, %v2124
    %v2126 = vrot.slane %v2092, %v2125
    %v2135 = vmul.f32 %v1921, %v2098
    %v2136 = vmul.f32 %v1922, %v2102
    %v2137 = vmul.f32 %v1923, %v2106
    %v2138 = vmul.f32 %v1924, %v2110
    %v2139 = vmul.f32 %v1925, %v2114
    %v2140 = vmul.f32 %v1926, %v2118
    %v2141 = vmul.f32 %v1927, %v2122
    %v2142 = vmul.f32 %v1928, %v2126
    %v2151 = vcombine.low %v2135, %v2136
    %v2152 = vcombine.low %v2137, %v2138
    %v2153 = vcombine.low %v2139, %v2140
    %v2154 = vcombine.low %v2141, %v2142
    %v2156 = vunpack.c.l.s4 1966171168
    %v2157 = vunpack.c.0.s8 %v2156
    %v2158 = vlaneseq
    %v2159 = vshrl.u32 %v2158, 7
    %v2160 = vsub.s32 %v2157, %v2159
    %v2161 = vrot.slane %v2151, %v2160
    %v2163 = vunpack.c.l.s4 1966171168
    %v2164 = vunpack.c.0.s8 %v2163
    %v2165 = vlaneseq
    %v2166 = vshrl.u32 %v2165, 7
    %v2167 = vsub.s32 %v2164, %v2166
    %v2168 = vrot.slane %v2152, %v2167
    %v2170 = vunpack.c.l.s4 1966171168
    %v2171 = vunpack.c.0.s8 %v2170
    %v2172 = vlaneseq
    %v2173 = vshrl.u32 %v2172, 7
    %v2174 = vsub.s32 %v2171, %v2173
    %v2175 = vrot.slane %v2153, %v2174
    %v2177 = vunpack.c.l.s4 1966171168
    %v2178 = vunpack.c.0.s8 %v2177
    %v2179 = vlaneseq
    %v2180 = vshrl.u32 %v2179, 7
    %v2181 = vsub.s32 %v2178, %v2180
    %v2182 = vrot.slane %v2154, %v2181
    %v2183 = vcombine.low %v2161, %v2168
    %v2184 = vcombine.low %v2175, %v2182
    %v2186 = vunpack.c.l.s4 1966171168
    %v2187 = vunpack.c.0.s8 %v2186
    %v2188 = vlaneseq
    %v2189 = vshrl.u32 %v2188, 7
    %v2190 = vsub.s32 %v2187, %v2189
    %v2191 = vrot.slane %v2183, %v2190
    %v2193 = vunpack.c.l.s4 1966171168
    %v2194 = vunpack.c.0.s8 %v2193
    %v2195 = vlaneseq
    %v2196 = vshrl.u32 %v2195, 7
    %v2197 = vsub.s32 %v2194, %v2196
    %v2198 = vrot.slane %v2184, %v2197
    %v2199 = vcombine.low %v2191, %v2198
    %v2201 = vsub.f32 %v2093, %v2199
    %v2202 = vmul.f32 %v1621, %v2098
    %v2203 = vmul.f32 %v1623, %v2102
    %v2204 = vmul.f32 %v1703, %v2106
    %v2205 = vmul.f32 %v1705, %v2110
    %v2206 = vmul.f32 %v1785, %v2114
    %v2207 = vmul.f32 %v1787, %v2118
    %v2208 = vmul.f32 %v1867, %v2122
    %v2209 = vmul.f32 %v1869, %v2126
    %v2211 = vlaneseq
    %v2212 = vshrl.u32 %v2211, 7
    %v2213 = vsub.s32 0, %v2212
    %v2214 = vrot.slane %v2201, %v2213
    %v2215 = vlaneseq
    %v2216 = vshrl.u32 %v2215, 7
    %v2217 = vsub.s32 1, %v2216
    %v2218 = vrot.slane %v2201, %v2217
    %v2219 = vlaneseq
    %v2220 = vshrl.u32 %v2219, 7
    %v2221 = vsub.s32 2, %v2220
    %v2222 = vrot.slane %v2201, %v2221
    %v2223 = vlaneseq
    %v2224 = vshrl.u32 %v2223, 7
    %v2225 = vsub.s32 3, %v2224
    %v2226 = vrot.slane %v2201, %v2225
    %v2227 = vlaneseq
    %v2228 = vshrl.u32 %v2227, 7
    %v2229 = vsub.s32 4, %v2228
    %v2230 = vrot.slane %v2201, %v2229
    %v2231 = vlaneseq
    %v2232 = vshrl.u32 %v2231, 7
    %v2233 = vsub.s32 5, %v2232
    %v2234 = vrot.slane %v2201, %v2233
    %v2235 = vlaneseq
    %v2236 = vshrl.u32 %v2235, 7
    %v2237 = vsub.s32 6, %v2236
    %v2238 = vrot.slane %v2201, %v2237
    %v2239 = vlaneseq
    %v2240 = vshrl.u32 %v2239, 7
    %v2241 = vsub.s32 7, %v2240
    %v2242 = vrot.slane %v2201, %v2241
    %v2251 = vadd.f32 %v2202, %v2214
    %v2252 = vadd.f32 %v2203, %v2218
    %v2253 = vadd.f32 %v2204, %v2222
    %v2254 = vadd.f32 %v2205, %v2226
    %v2255 = vadd.f32 %v2206, %v2230
    %v2256 = vadd.f32 %v2207, %v2234
    %v2257 = vadd.f32 %v2208, %v2238
    %v2258 = vadd.f32 %v2209, %v2242
    %v2259 = vmul.f32 %v2251, 0.2
    %v2260 = vmul.f32 %v2252, 0.2
    %v2261 = vmul.f32 %v2253, 0.2
    %v2262 = vmul.f32 %v2254, 0.2
    %v2263 = vmul.f32 %v2255, 0.2
    %v2264 = vmul.f32 %v2256, 0.2
    %v2265 = vmul.f32 %v2257, 0.2
    %v2266 = vmul.f32 %v2258, 0.2
    %v2267 = vmax.f32 %v2251, %v2259
    %v2268 = vmax.f32 %v2252, %v2260
    %v2269 = vmax.f32 %v2253, %v2261
    %v2270 = vmax.f32 %v2254, %v2262
    %v2271 = vmax.f32 %v2255, %v2263
    %v2272 = vmax.f32 %v2256, %v2264
    %v2273 = vmax.f32 %v2257, %v2265
    %v2274 = vmax.f32 %v2258, %v2266
    %s2275 = smul.u32 4, 128
    %s2276 = smul.u32 %s2275, 2
    %s2277 = sshll.u32 %s2276, 4
    %2278 = dma.done %s176, %s2277
    %v2279 = vld [vmem:[#allocation3] sm:$0xff]
    %v2280 = vld [vmem:[#allocation3 + $0x8] sm:$0xff]
    %v2281 = vld [vmem:[#allocation3 + $0x10] sm:$0xff]
    %v2282 = vld [vmem:[#allocation3 + $0x18] sm:$0xff]
    %v2283 = vld [vmem:[#allocation3 + $0x20] sm:$0xff]
    %v2284 = vld [vmem:[#allocation3 + $0x28] sm:$0xff]
    %v2285 = vld [vmem:[#allocation3 + $0x30] sm:$0xff]
    %v2286 = vld [vmem:[#allocation3 + $0x38] sm:$0xff]
    %v2287 = vld [vmem:[#allocation3 + $0x40] sm:$0xff]
    %v2288 = vld [vmem:[#allocation3 + $0x48] sm:$0xff]
    %v2289 = vld [vmem:[#allocation3 + $0x50] sm:$0xff]
    %v2290 = vld [vmem:[#allocation3 + $0x58] sm:$0xff]
    %v2291 = vld [vmem:[#allocation3 + $0x60] sm:$0xff]
    %v2292 = vld [vmem:[#allocation3 + $0x68] sm:$0xff]
    %v2293 = vld [vmem:[#allocation3 + $0x70] sm:$0xff]
    %v2294 = vld [vmem:[#allocation3 + $0x78] sm:$0xff]
    %v2295 = vld [vmem:[#allocation3 + $0x80] sm:$0xff]
    %v2296 = vld [vmem:[#allocation3 + $0x88] sm:$0xff]
    %v2297 = vld [vmem:[#allocation3 + $0x90] sm:$0xff]
    %v2298 = vld [vmem:[#allocation3 + $0x98] sm:$0xff]
    %v2299 = vld [vmem:[#allocation3 + $0xa0] sm:$0xff]
    %v2300 = vld [vmem:[#allocation3 + $0xa8] sm:$0xff]
    %v2301 = vld [vmem:[#allocation3 + $0xb0] sm:$0xff]
    %v2302 = vld [vmem:[#allocation3 + $0xb8] sm:$0xff]
    %v2303 = vld [vmem:[#allocation3 + $0xc0] sm:$0xff]
    %v2304 = vld [vmem:[#allocation3 + $0xc8] sm:$0xff]
    %v2305 = vld [vmem:[#allocation3 + $0xd0] sm:$0xff]
    %v2306 = vld [vmem:[#allocation3 + $0xd8] sm:$0xff]
    %v2307 = vld [vmem:[#allocation3 + $0xe0] sm:$0xff]
    %v2308 = vld [vmem:[#allocation3 + $0xe8] sm:$0xff]
    %v2309 = vld [vmem:[#allocation3 + $0xf0] sm:$0xff]
    %v2310 = vld [vmem:[#allocation3 + $0xf8] sm:$0xff]
    %v2311 = vld [vmem:[#allocation3 + $0x100] sm:$0xff]
    %v2312 = vld [vmem:[#allocation3 + $0x108] sm:$0xff]
    %v2313 = vld [vmem:[#allocation3 + $0x110] sm:$0xff]
    %v2314 = vld [vmem:[#allocation3 + $0x118] sm:$0xff]
    %v2315 = vld [vmem:[#allocation3 + $0x120] sm:$0xff]
    %v2316 = vld [vmem:[#allocation3 + $0x128] sm:$0xff]
    %v2317 = vld [vmem:[#allocation3 + $0x130] sm:$0xff]
    %v2318 = vld [vmem:[#allocation3 + $0x138] sm:$0xff]
    %v2319 = vld [vmem:[#allocation3 + $0x140] sm:$0xff]
    %v2320 = vld [vmem:[#allocation3 + $0x148] sm:$0xff]
    %v2321 = vld [vmem:[#allocation3 + $0x150] sm:$0xff]
    %v2322 = vld [vmem:[#allocation3 + $0x158] sm:$0xff]
    %v2323 = vld [vmem:[#allocation3 + $0x160] sm:$0xff]
    %v2324 = vld [vmem:[#allocation3 + $0x168] sm:$0xff]
    %v2325 = vld [vmem:[#allocation3 + $0x170] sm:$0xff]
    %v2326 = vld [vmem:[#allocation3 + $0x178] sm:$0xff]
    %v2327 = vld [vmem:[#allocation3 + $0x180] sm:$0xff]
    %v2328 = vld [vmem:[#allocation3 + $0x188] sm:$0xff]
    %v2329 = vld [vmem:[#allocation3 + $0x190] sm:$0xff]
    %v2330 = vld [vmem:[#allocation3 + $0x198] sm:$0xff]
    %v2331 = vld [vmem:[#allocation3 + $0x1a0] sm:$0xff]
    %v2332 = vld [vmem:[#allocation3 + $0x1a8] sm:$0xff]
    %v2333 = vld [vmem:[#allocation3 + $0x1b0] sm:$0xff]
    %v2334 = vld [vmem:[#allocation3 + $0x1b8] sm:$0xff]
    %v2335 = vld [vmem:[#allocation3 + $0x1c0] sm:$0xff]
    %v2336 = vld [vmem:[#allocation3 + $0x1c8] sm:$0xff]
    %v2337 = vld [vmem:[#allocation3 + $0x1d0] sm:$0xff]
    %v2338 = vld [vmem:[#allocation3 + $0x1d8] sm:$0xff]
    %v2339 = vld [vmem:[#allocation3 + $0x1e0] sm:$0xff]
    %v2340 = vld [vmem:[#allocation3 + $0x1e8] sm:$0xff]
    %v2341 = vld [vmem:[#allocation3 + $0x1f0] sm:$0xff]
    %v2342 = vld [vmem:[#allocation3 + $0x1f8] sm:$0xff]
    %v2343 = vld [vmem:[#allocation3 + $0x200] sm:$0xff]
    %v2344 = vld [vmem:[#allocation3 + $0x208] sm:$0xff]
    %v2345 = vld [vmem:[#allocation3 + $0x210] sm:$0xff]
    %v2346 = vld [vmem:[#allocation3 + $0x218] sm:$0xff]
    %v2347 = vld [vmem:[#allocation3 + $0x220] sm:$0xff]
    %v2348 = vld [vmem:[#allocation3 + $0x228] sm:$0xff]
    %v2349 = vld [vmem:[#allocation3 + $0x230] sm:$0xff]
    %v2350 = vld [vmem:[#allocation3 + $0x238] sm:$0xff]
    %v2351 = vld [vmem:[#allocation3 + $0x240] sm:$0xff]
    %v2352 = vld [vmem:[#allocation3 + $0x248] sm:$0xff]
    %v2353 = vld [vmem:[#allocation3 + $0x250] sm:$0xff]
    %v2354 = vld [vmem:[#allocation3 + $0x258] sm:$0xff]
    %v2355 = vld [vmem:[#allocation3 + $0x260] sm:$0xff]
    %v2356 = vld [vmem:[#allocation3 + $0x268] sm:$0xff]
    %v2357 = vld [vmem:[#allocation3 + $0x270] sm:$0xff]
    %v2358 = vld [vmem:[#allocation3 + $0x278] sm:$0xff]
    %v2359 = vld [vmem:[#allocation3 + $0x280] sm:$0xff]
    %v2360 = vld [vmem:[#allocation3 + $0x288] sm:$0xff]
    %v2361 = vld [vmem:[#allocation3 + $0x290] sm:$0xff]
    %v2362 = vld [vmem:[#allocation3 + $0x298] sm:$0xff]
    %v2363 = vld [vmem:[#allocation3 + $0x2a0] sm:$0xff]
    %v2364 = vld [vmem:[#allocation3 + $0x2a8] sm:$0xff]
    %v2365 = vld [vmem:[#allocation3 + $0x2b0] sm:$0xff]
    %v2366 = vld [vmem:[#allocation3 + $0x2b8] sm:$0xff]
    %v2367 = vld [vmem:[#allocation3 + $0x2c0] sm:$0xff]
    %v2368 = vld [vmem:[#allocation3 + $0x2c8] sm:$0xff]
    %v2369 = vld [vmem:[#allocation3 + $0x2d0] sm:$0xff]
    %v2370 = vld [vmem:[#allocation3 + $0x2d8] sm:$0xff]
    %v2371 = vld [vmem:[#allocation3 + $0x2e0] sm:$0xff]
    %v2372 = vld [vmem:[#allocation3 + $0x2e8] sm:$0xff]
    %v2373 = vld [vmem:[#allocation3 + $0x2f0] sm:$0xff]
    %v2374 = vld [vmem:[#allocation3 + $0x2f8] sm:$0xff]
    %v2375 = vld [vmem:[#allocation3 + $0x300] sm:$0xff]
    %v2376 = vld [vmem:[#allocation3 + $0x308] sm:$0xff]
    %v2377 = vld [vmem:[#allocation3 + $0x310] sm:$0xff]
    %v2378 = vld [vmem:[#allocation3 + $0x318] sm:$0xff]
    %v2379 = vld [vmem:[#allocation3 + $0x320] sm:$0xff]
    %v2380 = vld [vmem:[#allocation3 + $0x328] sm:$0xff]
    %v2381 = vld [vmem:[#allocation3 + $0x330] sm:$0xff]
    %v2382 = vld [vmem:[#allocation3 + $0x338] sm:$0xff]
    %v2383 = vld [vmem:[#allocation3 + $0x340] sm:$0xff]
    %v2384 = vld [vmem:[#allocation3 + $0x348] sm:$0xff]
    %v2385 = vld [vmem:[#allocation3 + $0x350] sm:$0xff]
    %v2386 = vld [vmem:[#allocation3 + $0x358] sm:$0xff]
    %v2387 = vld [vmem:[#allocation3 + $0x360] sm:$0xff]
    %v2388 = vld [vmem:[#allocation3 + $0x368] sm:$0xff]
    %v2389 = vld [vmem:[#allocation3 + $0x370] sm:$0xff]
    %v2390 = vld [vmem:[#allocation3 + $0x378] sm:$0xff]
    %v2391 = vld [vmem:[#allocation3 + $0x380] sm:$0xff]
    %v2392 = vld [vmem:[#allocation3 + $0x388] sm:$0xff]
    %v2393 = vld [vmem:[#allocation3 + $0x390] sm:$0xff]
    %v2394 = vld [vmem:[#allocation3 + $0x398] sm:$0xff]
    %v2395 = vld [vmem:[#allocation3 + $0x3a0] sm:$0xff]
    %v2396 = vld [vmem:[#allocation3 + $0x3a8] sm:$0xff]
    %v2397 = vld [vmem:[#allocation3 + $0x3b0] sm:$0xff]
    %v2398 = vld [vmem:[#allocation3 + $0x3b8] sm:$0xff]
    %v2399 = vld [vmem:[#allocation3 + $0x3c0] sm:$0xff]
    %v2400 = vld [vmem:[#allocation3 + $0x3c8] sm:$0xff]
    %v2401 = vld [vmem:[#allocation3 + $0x3d0] sm:$0xff]
    %v2402 = vld [vmem:[#allocation3 + $0x3d8] sm:$0xff]
    %v2403 = vld [vmem:[#allocation3 + $0x3e0] sm:$0xff]
    %v2404 = vld [vmem:[#allocation3 + $0x3e8] sm:$0xff]
    %v2405 = vld [vmem:[#allocation3 + $0x3f0] sm:$0xff]
    %v2406 = vld [vmem:[#allocation3 + $0x3f8] sm:$0xff]
    %v2407 = vpack.c.bf16 %v2267, %v2267
    %v2408 = vpack.c.bf16 %v2268, %v2268
    %v2409 = vpack.c.bf16 %v2269, %v2269
    %v2410 = vpack.c.bf16 %v2270, %v2270
    %v2411 = vpack.c.bf16 %v2271, %v2271
    %v2412 = vpack.c.bf16 %v2272, %v2272
    %v2413 = vpack.c.bf16 %v2273, %v2273
    %v2414 = vpack.c.bf16 %v2274, %v2274
    %v2415 = vld [vmem:[%s16] sm:$0x3]
    %v2417 = vlaneseq
    %v2418 = vshrl.u32 %v2417, 7
    %v2419 = vsub.s32 0, %v2418
    %v2420 = vrot.slane %v2415, %v2419
    %v2421 = vlaneseq
    %v2422 = vshrl.u32 %v2421, 7
    %v2423 = vsub.s32 1, %v2422
    %v2424 = vrot.slane %v2415, %v2423
    %2427 = vmatprep.subr.bf16.mxu0 %v2280
    %2428 = vmatpush1.bf16.msra.mxu0 %v2279
    %2429 = vmatprep.subr.bf16.mxu0 %v2282
    %2430 = vmatpush1.bf16.msra.mxu0 %v2281
    %2431 = vmatprep.subr.bf16.mxu0 %v2284
    %2432 = vmatpush1.bf16.msra.mxu0 %v2283
    %2433 = vmatprep.subr.bf16.mxu0 %v2286
    %2434 = vmatpush1.bf16.msra.mxu0 %v2285
    %2435 = vmatprep.subr.bf16.mxu0 %v2288
    %2436 = vmatpush1.bf16.msra.mxu0 %v2287
    %2437 = vmatprep.subr.bf16.mxu0 %v2290
    %2438 = vmatpush1.bf16.msra.mxu0 %v2289
    %2439 = vmatprep.subr.bf16.mxu0 %v2292
    %2440 = vmatpush1.bf16.msra.mxu0 %v2291
    %2441 = vmatprep.subr.bf16.mxu0 %v2294
    %2442 = vmatpush1.bf16.msra.mxu0 %v2293
    %2443 = vmatprep.subr.bf16.mxu0 %v2296
    %2444 = vmatpush1.bf16.msra.mxu0 %v2295
    %2445 = vmatprep.subr.bf16.mxu0 %v2298
    %2446 = vmatpush1.bf16.msra.mxu0 %v2297
    %2447 = vmatprep.subr.bf16.mxu0 %v2300
    %2448 = vmatpush1.bf16.msra.mxu0 %v2299
    %2449 = vmatprep.subr.bf16.mxu0 %v2302
    %2450 = vmatpush1.bf16.msra.mxu0 %v2301
    %2451 = vmatprep.subr.bf16.mxu0 %v2304
    %2452 = vmatpush1.bf16.msra.mxu0 %v2303
    %2453 = vmatprep.subr.bf16.mxu0 %v2306
    %2454 = vmatpush1.bf16.msra.mxu0 %v2305
    %2455 = vmatprep.subr.bf16.mxu0 %v2308
    %2456 = vmatpush1.bf16.msra.mxu0 %v2307
    %2457 = vmatprep.subr.bf16.mxu0 %v2310
    %2458 = vmatpush1.bf16.msra.mxu0 %v2309
    %2459 = vmatprep.mubr.bf16.mxu0 %v2408
    %2460 = vmatmul.mubr.bf16.gmra.mrb[0].mxu0 %v2407
    %v2461 = vpop.f32.mrb[0].mxu0
    %v2462 = vadd.f32 %v2420, %v2461
    %v2463 = vpop.f32.mrb[0].mxu0
    %v2464 = vadd.f32 %v2424, %v2463
    %v2465 = vpop.f32.mrb[0].mxu0
    %v2466 = vpop.f32.mrb[0].mxu0
    %2467 = vdwg.mxu0
    %2468 = vmatprep.subr.bf16.mxu0 %v2312
    %2469 = vmatpush1.bf16.msra.mxu0 %v2311
    %2470 = vmatprep.subr.bf16.mxu0 %v2314
    %2471 = vmatpush1.bf16.msra.mxu0 %v2313
    %2472 = vmatprep.subr.bf16.mxu0 %v2316
    %2473 = vmatpush1.bf16.msra.mxu0 %v2315
    %2474 = vmatprep.subr.bf16.mxu0 %v2318
    %2475 = vmatpush1.bf16.msra.mxu0 %v2317
    %2476 = vmatprep.subr.bf16.mxu0 %v2320
    %2477 = vmatpush1.bf16.msra.mxu0 %v2319
    %2478 = vmatprep.subr.bf16.mxu0 %v2322
    %2479 = vmatpush1.bf16.msra.mxu0 %v2321
    %2480 = vmatprep.subr.bf16.mxu0 %v2324
    %2481 = vmatpush1.bf16.msra.mxu0 %v2323
    %2482 = vmatprep.subr.bf16.mxu0 %v2326
    %2483 = vmatpush1.bf16.msra.mxu0 %v2325
    %2484 = vmatprep.subr.bf16.mxu0 %v2328
    %2485 = vmatpush1.bf16.msra.mxu0 %v2327
    %2486 = vmatprep.subr.bf16.mxu0 %v2330
    %2487 = vmatpush1.bf16.msra.mxu0 %v2329
    %2488 = vmatprep.subr.bf16.mxu0 %v2332
    %2489 = vmatpush1.bf16.msra.mxu0 %v2331
    %2490 = vmatprep.subr.bf16.mxu0 %v2334
    %2491 = vmatpush1.bf16.msra.mxu0 %v2333
    %2492 = vmatprep.subr.bf16.mxu0 %v2336
    %2493 = vmatpush1.bf16.msra.mxu0 %v2335
    %2494 = vmatprep.subr.bf16.mxu0 %v2338
    %2495 = vmatpush1.bf16.msra.mxu0 %v2337
    %2496 = vmatprep.subr.bf16.mxu0 %v2340
    %2497 = vmatpush1.bf16.msra.mxu0 %v2339
    %2498 = vmatprep.subr.bf16.mxu0 %v2342
    %2499 = vmatpush1.bf16.msra.mxu0 %v2341
    %2500 = vmatprep.mubr.bf16.mxu0 %v2410
    %2501 = vmatmul.mubr.bf16.gmra.mrb[0].mxu0 %v2409
    %v2502 = vpop.f32.mrb[0].mxu0
    %v2503 = vadd.f32 %v2462, %v2502
    %v2504 = vpop.f32.mrb[0].mxu0
    %v2505 = vadd.f32 %v2464, %v2504
    %v2506 = vpop.f32.mrb[0].mxu0
    %v2507 = vpop.f32.mrb[0].mxu0
    %2508 = vdwg.mxu0
    %2509 = vmatprep.subr.bf16.mxu0 %v2344
    %2510 = vmatpush1.bf16.msra.mxu0 %v2343
    %2511 = vmatprep.subr.bf16.mxu0 %v2346
    %2512 = vmatpush1.bf16.msra.mxu0 %v2345
    %2513 = vmatprep.subr.bf16.mxu0 %v2348
    %2514 = vmatpush1.bf16.msra.mxu0 %v2347
    %2515 = vmatprep.subr.bf16.mxu0 %v2350
    %2516 = vmatpush1.bf16.msra.mxu0 %v2349
    %2517 = vmatprep.subr.bf16.mxu0 %v2352
    %2518 = vmatpush1.bf16.msra.mxu0 %v2351
    %2519 = vmatprep.subr.bf16.mxu0 %v2354
    %2520 = vmatpush1.bf16.msra.mxu0 %v2353
    %2521 = vmatprep.subr.bf16.mxu0 %v2356
    %2522 = vmatpush1.bf16.msra.mxu0 %v2355
    %2523 = vmatprep.subr.bf16.mxu0 %v2358
    %2524 = vmatpush1.bf16.msra.mxu0 %v2357
    %2525 = vmatprep.subr.bf16.mxu0 %v2360
    %2526 = vmatpush1.bf16.msra.mxu0 %v2359
    %2527 = vmatprep.subr.bf16.mxu0 %v2362
    %2528 = vmatpush1.bf16.msra.mxu0 %v2361
    %2529 = vmatprep.subr.bf16.mxu0 %v2364
    %2530 = vmatpush1.bf16.msra.mxu0 %v2363
    %2531 = vmatprep.subr.bf16.mxu0 %v2366
    %2532 = vmatpush1.bf16.msra.mxu0 %v2365
    %2533 = vmatprep.subr.bf16.mxu0 %v2368
    %2534 = vmatpush1.bf16.msra.mxu0 %v2367
    %2535 = vmatprep.subr.bf16.mxu0 %v2370
    %2536 = vmatpush1.bf16.msra.mxu0 %v2369
    %2537 = vmatprep.subr.bf16.mxu0 %v2372
    %2538 = vmatpush1.bf16.msra.mxu0 %v2371
    %2539 = vmatprep.subr.bf16.mxu0 %v2374
    %2540 = vmatpush1.bf16.msra.mxu0 %v2373
    %2541 = vmatprep.mubr.bf16.mxu0 %v2412
    %2542 = vmatmul.mubr.bf16.gmra.mrb[0].mxu0 %v2411
    %v2543 = vpop.f32.mrb[0].mxu0
    %v2544 = vadd.f32 %v2503, %v2543
    %v2545 = vpop.f32.mrb[0].mxu0
    %v2546 = vadd.f32 %v2505, %v2545
    %v2547 = vpop.f32.mrb[0].mxu0
    %v2548 = vpop.f32.mrb[0].mxu0
    %2549 = vdwg.mxu0
    %2550 = vmatprep.subr.bf16.mxu0 %v2376
    %2551 = vmatpush1.bf16.msra.mxu0 %v2375
    %2552 = vmatprep.subr.bf16.mxu0 %v2378
    %2553 = vmatpush1.bf16.msra.mxu0 %v2377
    %2554 = vmatprep.subr.bf16.mxu0 %v2380
    %2555 = vmatpush1.bf16.msra.mxu0 %v2379
    %2556 = vmatprep.subr.bf16.mxu0 %v2382
    %2557 = vmatpush1.bf16.msra.mxu0 %v2381
    %2558 = vmatprep.subr.bf16.mxu0 %v2384
    %2559 = vmatpush1.bf16.msra.mxu0 %v2383
    %2560 = vmatprep.subr.bf16.mxu0 %v2386
    %2561 = vmatpush1.bf16.msra.mxu0 %v2385
    %2562 = vmatprep.subr.bf16.mxu0 %v2388
    %2563 = vmatpush1.bf16.msra.mxu0 %v2387
    %2564 = vmatprep.subr.bf16.mxu0 %v2390
    %2565 = vmatpush1.bf16.msra.mxu0 %v2389
    %2566 = vmatprep.subr.bf16.mxu0 %v2392
    %2567 = vmatpush1.bf16.msra.mxu0 %v2391
    %2568 = vmatprep.subr.bf16.mxu0 %v2394
    %2569 = vmatpush1.bf16.msra.mxu0 %v2393
    %2570 = vmatprep.subr.bf16.mxu0 %v2396
    %2571 = vmatpush1.bf16.msra.mxu0 %v2395
    %2572 = vmatprep.subr.bf16.mxu0 %v2398
    %2573 = vmatpush1.bf16.msra.mxu0 %v2397
    %2574 = vmatprep.subr.bf16.mxu0 %v2400
    %2575 = vmatpush1.bf16.msra.mxu0 %v2399
    %2576 = vmatprep.subr.bf16.mxu0 %v2402
    %2577 = vmatpush1.bf16.msra.mxu0 %v2401
    %2578 = vmatprep.subr.bf16.mxu0 %v2404
    %2579 = vmatpush1.bf16.msra.mxu0 %v2403
    %2580 = vmatprep.subr.bf16.mxu0 %v2406
    %2581 = vmatpush1.bf16.msra.mxu0 %v2405
    %2582 = vmatprep.mubr.bf16.mxu0 %v2414
    %2583 = vmatmul.mubr.bf16.gmra.mrb[0].mxu0 %v2413
    %v2584 = vpop.f32.mrb[0].mxu0
    %v2585 = vadd.f32 %v2544, %v2584
    %v2586 = vpop.f32.mrb[0].mxu0
    %v2587 = vadd.f32 %v2546, %v2586
    %v2588 = vpop.f32.mrb[0].mxu0
    %v2589 = vpop.f32.mrb[0].mxu0
    %2590 = vdwg.mxu0
    %v2591 = vtanh.pop %v2585
    %v2592 = vtanh.pop %v2587
    %2593 = vst [vmem:[#allocation17] sm:$0xff] %v2591
    %2594 = vst [vmem:[#allocation17 + $0x8] sm:$0xff] %v2592
    // Predicated region
    $region90: #{tpu_custom_call.1} parent=1 // pred_check
      _
    $region91: #{tpu_custom_call.1} parent=1 // pred_check_branch
      %2596 = sbr.rel (0) target = $region93
    $region92: #{tpu_custom_call.1} parent=1 // pred_region
      %s2598 = ssub.s32 256, 256
      %2599 = vsyncadd [#allocation7], %s2598
      %s2601 = sshll.u32 [#allocation17], 4
      %s2602 = int_to_ptr.vmem [resolvable:$true] %s2601
      %2604 = dma.vmem_to_hbm [thread:$0]  %s2602, 256, %s17, [#allocation7]
    $region93: #{tpu_custom_call.1} parent=1 // pred_fallthru
      _
    // Predicated region
    $region94: #{tpu_custom_call.1} parent=1 // pred_check
      _
    $region95: #{tpu_custom_call.1} parent=1 // pred_check_branch
      %2606 = sbr.rel (0) target = $region97
    $region96: #{tpu_custom_call.1} parent=1 // pred_region
      %2607 = dma.done [#allocation7], 256
    $region97: #{tpu_custom_call.1} parent=1 // pred_fallthru
      _
    %2608 = vsyncpa [#allocation6], 1
    %2609 = vsyncpa [#allocation9], 1
    %2610 = vsyncpa [#allocation12], 1
    %2611 = vsyncpa [#allocation15], 1
    %2612 = vsyncpa [#allocation7], 1
  %2613 = vsyncmov [#allocation4]
  %s2614 = vpop.sfrf %2613
  %p2615 = scmp.eq.s32.totalorder %s2614, 0
  %p2616 = pneg %p2615
  %2618 = shalt.err (%p2616)
  %s2619 = scalar_lea.sflag [#allocation4], 1
  %2620 = vsyncmov %s2619
  %s2621 = vpop.sfrf %2620
  %p2622 = scmp.eq.s32.totalorder %s2621, 0
  %p2623 = pneg %p2622
  %2625 = shalt.err (%p2623)

</llo_original>
